<compile_context>
chip_gen: v7x
topology: tpu7x:2x2x1
jax: 0.10.0
libtpu: 0.0.40
codegen_flags: <defaults>
</compile_context>

<pallas_src>
import jax
import jax.numpy as jnp
from jax import lax
from jax.experimental import pallas as pl
from jax.experimental.pallas import tpu as pltpu

NUM_RANKS = 10
NUM_DIST = 7                          # len(distortion_types)
NUM_CLASSES = NUM_RANKS * NUM_DIST    # 70 "rank x distortion" text prompts
C_PAD = 128                           # class axis padded to one full lane tile
EMBED_DIM = 128                       # small stand-in for CLIP's 512-d embedding
QUAL_COL = NUM_DIST                   # column of the fused selector holding quality

_VMEM_LIMIT = 32 * 1024 * 1024        # explicit (exceeds v5e's 16 MiB scoped default,
                                      # safely under v7x's 64 MiB physical VMEM)
_VMEM_TILE_BUDGET = 24 * 1024 * 1024  # headroom inside the 32 MiB limit


# --------------------------- fully fused kernel ------------------------------
def _v9_fused_kernel(x_ref, w_ref, txt_ref, sel_ref, o_ref):
    """encoder matmul + L2 norm + viewport mean + text logits + softmax + head."""
    tn = x_ref.shape[0]                    # rows in tile (= tb * num_viewport)
    tb = o_ref.shape[0]                    # batches in tile
    n_view = tn // tb

    # Stand-in image encoder: f32 pixels cast to bf16 here (in-kernel, per tile),
    # bf16 MXU matmul with f32 accumulation.
    img = jnp.dot(x_ref[...].astype(jnp.bfloat16), w_ref[...],
                  preferred_element_type=jnp.float32)             # (tn, D)

    # L2 normalize (no epsilon: parity with PyTorch divide-by-norm).
    img = img * lax.rsqrt(jnp.sum(img * img, axis=-1, keepdims=True))
    img_b = img.astype(jnp.bfloat16)

    # Viewport mean done on the normalized features (projection is linear, so
    # this equals the mean of the logits).  A tiny pooling-matrix matmul avoids
    # any in-kernel reshape/relayout; rows of one batch are contiguous
    # (row = b * n_view + v).  Built with compares only (no integer division).
    row = lax.broadcasted_iota(jnp.int32, (tb, tn), 0)
    col = lax.broadcasted_iota(jnp.int32, (tb, tn), 1)
    lo = row * n_view
    pool = jnp.where((col >= lo) & (col < lo + n_view),
                     jnp.float32(1.0 / n_view), jnp.float32(0.0))
    pooled = jnp.dot(pool.astype(jnp.bfloat16), img_b,
                     preferred_element_type=jnp.float32)          # (tb, D)

    # Scaled logits vs pre-normalized / pre-scaled / transposed text features.
    logits = jnp.dot(pooled.astype(jnp.bfloat16), txt_ref[...],
                     preferred_element_type=jnp.float32)          # (tb, C_PAD)

    # Softmax over the 70 real classes; padded lanes masked to -inf so they
    # get exactly zero probability.  Exact divide (torch.softmax parity).
    cls = lax.broadcasted_iota(jnp.int32, (tb, C_PAD), 1)
    logits = jnp.where(cls < NUM_CLASSES, logits, -jnp.inf)
    m = jnp.max(logits, axis=-1, keepdims=True)
    e = jnp.exp(logits - m)
    p = e / jnp.sum(e, axis=-1, keepdims=True)

    # Fused rank/distortion marginalization:
    #   cols [0:7] -> logits_distortion (sum over ranks)
    #   col  7     -> logits_quality    (rank weights folded into the selector)
    o_ref[...] = jnp.dot(p, sel_ref[...],
                         preferred_element_type=jnp.float32)      # (tb, C_PAD)


# ------------------------------ tile selection --------------------------------
def _pick_batch_tile(batch, n_view, p_dim, d_dim):
    """Batches per row-block: batch-aligned, multiple of 8 when possible, fits
    the VMEM budget, and prefers >=2 blocks so v7x can use both TensorCores."""
    resident = (p_dim * d_dim * 2           # encoder weight, bf16
                + d_dim * C_PAD * 2         # text operand, bf16
                + C_PAD * C_PAD * 4)        # selector, f32

    def fits(tb):
        tn = tb * n_view
        tile = 2 * tn * p_dim * 4 + 2 * tb * C_PAD * 4   # double-buffered x / out
        return resident + tile <= _VMEM_TILE_BUDGET

    cands = (256, 128, 64, 32, 16, 8)       # multiples of 8 (sublane friendly)
    for tb in cands:                         # prefer >=2 row blocks (v7x megacore)
        if tb <= batch // 2 and batch % tb == 0 and fits(tb):
            return tb
    for tb in cands:
        if tb <= batch and batch % tb == 0 and fits(tb):
            return tb
    if fits(batch):
        return batch                         # single block (small batches)
    # TODO(synk): K-tiled accumulator path for encoders whose (P, D) weight /
    # full-P row tiles do not fit resident in VMEM (real CLIP patch embed).
    raise NotImplementedError("encoder too large for the fused resident-weight kernel")


# ------------------------- one-time model constants ---------------------------
def precompute_constants(w_img, txt_feat, logit_scale):
    """Hoisted out of the per-call forward: cast weights, fold the text L2-norm
    and logit_scale into a pre-transposed bf16 operand, build the selector."""
    w_bf16 = w_img.astype(jnp.bfloat16)                           # (P, D)

    txt = txt_feat.astype(jnp.float32)
    txt = txt * lax.rsqrt(jnp.sum(txt * txt, axis=-1, keepdims=True))
    txt = logit_scale * txt                                       # (70, D)
    txt = jnp.concatenate(
        [txt, jnp.zeros((C_PAD - NUM_CLASSES, txt.shape[1]), jnp.float32)],
        axis=0)                                                   # (C_PAD, D)
    txt_t = txt.T.astype(jnp.bfloat16)                            # (D, C_PAD)

    # Class index c = rank*NUM_DIST + distortion (distortion fastest-varying),
    # matching the PyTorch view(-1, num_ranks, len(distortion_types)).
    cls = jnp.arange(NUM_CLASSES)
    sel_dst = jax.nn.one_hot(cls % NUM_DIST, NUM_DIST, dtype=jnp.float32)   # (70, 7)
    qual_w = (cls // NUM_DIST + 1).astype(jnp.float32)[:, None]             # (70, 1)
    sel = jnp.concatenate(
        [sel_dst, qual_w,
         jnp.zeros((NUM_CLASSES, C_PAD - NUM_DIST - 1), jnp.float32)], axis=1)
    sel = jnp.concatenate(
        [sel, jnp.zeros((C_PAD - NUM_CLASSES, C_PAD), jnp.float32)], axis=0)  # (128,128)
    return w_bf16, txt_t, sel


# --------------------------------- forward ------------------------------------
def v9_forward(x, w_bf16, txt_t, sel):
    B, V = x.shape[0], x.shape[1]
    x_flat = x.reshape(B * V, -1)            # f32; cast to bf16 inside the kernel
    P = x_flat.shape[1]
    D = w_bf16.shape[1]
    tb = _pick_batch_tile(B, V, P, D)
    tn = tb * V

    # Constant-index blocks (weight / text / selector) are DMA'd once; default
    # double-buffering of them costs <1 MiB here (pl.Buffered(1) would trim it).
    out = pl.pallas_call(
        _v9_fused_kernel,
        out_shape=jax.ShapeDtypeStruct((B, C_PAD), jnp.float32),
        grid=(B // tb,),
        in_specs=[
            pl.BlockSpec((tn, P), lambda i: (i, 0)),          # image rows (f32)
            pl.BlockSpec((P, D), lambda i: (0, 0)),           # encoder weight (bf16)
            pl.BlockSpec((D, C_PAD), lambda i: (0, 0)),       # scaled text.T (bf16)
            pl.BlockSpec((C_PAD, C_PAD), lambda i: (0, 0)),   # selector (f32)
        ],
        out_specs=pl.BlockSpec((tb, C_PAD), lambda i: (i, 0)),
        compiler_params=pltpu.CompilerParams(
            dimension_semantics=("parallel",),
            vmem_limit_bytes=_VMEM_LIMIT,
        ),
    )(x_flat, w_bf16, txt_t, sel)

    return out[:, QUAL_COL], out[:, :NUM_DIST]   # (logits_quality, logits_distortion)


if __name__ == "__main__":
    key = jax.random.PRNGKey(0)
    k1, k2, k3 = jax.random.split(key, 3)

    B, V, Cimg, H, W = 2, 4, 3, 32, 32
    x = jax.random.normal(k1, (B, V, Cimg, H, W), dtype=jnp.float32)

    # Deterministic synthetic parameters (stand-ins for CLIP weights).
    w_img = 0.02 * jax.random.normal(k2, (Cimg * H * W, EMBED_DIM),
                                     dtype=jnp.float32)
    txt_feat = jax.random.normal(k3, (NUM_CLASSES, EMBED_DIM), dtype=jnp.float32)
    logit_scale = float(jnp.exp(jnp.log(1.0 / 0.07)))   # CLIP logit_scale.exp()

    # Built once per model, not per call.
    w_bf16, txt_t, sel = precompute_constants(w_img, txt_feat, logit_scale)

    fwd = jax.jit(v9_forward)
    logits_quality, logits_distortion = fwd(x, w_bf16, txt_t, sel)
    jax.block_until_ready((logits_quality, logits_distortion))

    assert logits_quality.shape == (B,)
    assert logits_distortion.shape == (B, NUM_DIST)
    assert bool(jnp.all(jnp.isfinite(logits_quality)))
    assert bool(jnp.all(jnp.isfinite(logits_distortion)))
    print("KERNEL_OK")
</pallas_src>

<mosaic_0001>
module attributes {stable_mosaic.version = 11 : i64} {
  func.func @_v9_fused_kernel(%arg0: i32, %arg1: memref<8x3072xf32, #tpu.memory_space<vmem>>, %arg2: memref<3072x128xbf16, #tpu.memory_space<vmem>>, %arg3: memref<128x128xbf16, #tpu.memory_space<vmem>>, %arg4: memref<128x128xf32, #tpu.memory_space<vmem>>, %arg5: memref<2x128xf32, #tpu.memory_space<vmem>>) attributes {dimension_semantics = [#tpu.dimension_semantics<parallel>], iteration_bounds = array<i64: 1>, scalar_prefetch = 0 : i64, scratch_operands = 0 : i64, tpu.core_type = #tpu.core_type<tc>, window_params = [{transform_indices = @transform_0, window_bounds = array<i64: 8, 3072>}, {pipeline_mode = #tpu.pipeline_mode<synchronous>, transform_indices = @transform_1, window_bounds = array<i64: 3072, 128>}, {pipeline_mode = #tpu.pipeline_mode<synchronous>, transform_indices = @transform_2, window_bounds = array<i64: 128, 128>}, {pipeline_mode = #tpu.pipeline_mode<synchronous>, transform_indices = @transform_3, window_bounds = array<i64: 128, 128>}, {transform_indices = @transform_4, window_bounds = array<i64: 2, 128>}]} {
    %c0 = arith.constant 0 : index
    %c0_0 = arith.constant 0 : index
    %0 = vector.load %arg1[%c0, %c0_0] : memref<8x3072xf32, #tpu.memory_space<vmem>>, vector<8x3072xf32>
    %1 = arith.truncf %0 : vector<8x3072xf32> to vector<8x3072xbf16>
    %c0_1 = arith.constant 0 : index
    %c0_2 = arith.constant 0 : index
    %2 = vector.load %arg2[%c0_1, %c0_2] : memref<3072x128xbf16, #tpu.memory_space<vmem>>, vector<3072x128xbf16>
    %cst = arith.constant dense<0.000000e+00> : vector<8x128xf32>
    %3 = tpu.matmul %1, %2, %cst {dimension_numbers = #tpu.dot_dimension_numbers<[1], [0], [0], [1], [0, 0, 1, 1], [], []>} : vector<8x3072xbf16>, vector<3072x128xbf16>, vector<8x128xf32> -> vector<8x128xf32>
    %4 = arith.mulf %3, %3 : vector<8x128xf32>
    %cst_3 = arith.constant dense<0.000000e+00> : vector<8xf32>
    %5 = vector.multi_reduction <add>, %4, %cst_3 [1] : vector<8x128xf32> to vector<8xf32>
    %6 = vector.shape_cast %5 : vector<8xf32> to vector<8x1xf32>
    %7 = math.rsqrt %6 : vector<8x1xf32>
    %8 = vector.broadcast %7 : vector<8x1xf32> to vector<8x128xf32>
    %9 = arith.mulf %3, %8 : vector<8x128xf32>
    %10 = arith.truncf %9 : vector<8x128xf32> to vector<8x128xbf16>
    %11 = tpu.iota {dimensions = array<i32: 0>} : vector<2x8xi32>
    %12 = tpu.iota {dimensions = array<i32: 1>} : vector<2x8xi32>
    %c4_i32 = arith.constant 4 : i32
    %13 = vector.broadcast %c4_i32 : i32 to vector<2x8xi32>
    %14 = arith.muli %11, %13 : vector<2x8xi32>
    %15 = arith.cmpi sge, %12, %14 : vector<2x8xi32>
    %c4_i32_4 = arith.constant 4 : i32
    %16 = vector.broadcast %c4_i32_4 : i32 to vector<2x8xi32>
    %17 = arith.addi %14, %16 : vector<2x8xi32>
    %18 = arith.cmpi slt, %12, %17 : vector<2x8xi32>
    %19 = arith.andi %15, %18 : vector<2x8xi1>
    %cst_5 = arith.constant 2.500000e-01 : f32
    %cst_6 = arith.constant 0.000000e+00 : f32
    %20 = vector.broadcast %cst_5 : f32 to vector<2x8xf32>
    %21 = vector.broadcast %cst_6 : f32 to vector<2x8xf32>
    %22 = arith.select %19, %20, %21 : vector<2x8xi1>, vector<2x8xf32>
    %23 = arith.truncf %22 : vector<2x8xf32> to vector<2x8xbf16>
    %cst_7 = arith.constant dense<0.000000e+00> : vector<2x128xf32>
    %24 = tpu.matmul %23, %10, %cst_7 {dimension_numbers = #tpu.dot_dimension_numbers<[1], [0], [0], [1], [0, 0, 1, 1], [], []>} : vector<2x8xbf16>, vector<8x128xbf16>, vector<2x128xf32> -> vector<2x128xf32>
    %25 = arith.truncf %24 : vector<2x128xf32> to vector<2x128xbf16>
    %c0_8 = arith.constant 0 : index
    %c0_9 = arith.constant 0 : index
    %26 = vector.load %arg3[%c0_8, %c0_9] : memref<128x128xbf16, #tpu.memory_space<vmem>>, vector<128x128xbf16>
    %cst_10 = arith.constant dense<0.000000e+00> : vector<2x128xf32>
    %27 = tpu.matmul %25, %26, %cst_10 {dimension_numbers = #tpu.dot_dimension_numbers<[1], [0], [0], [1], [0, 0, 1, 1], [], []>} : vector<2x128xbf16>, vector<128x128xbf16>, vector<2x128xf32> -> vector<2x128xf32>
    %28 = tpu.iota {dimensions = array<i32: 1>} : vector<2x128xi32>
    %c70_i32 = arith.constant 70 : i32
    %29 = vector.broadcast %c70_i32 : i32 to vector<2x128xi32>
    %30 = arith.cmpi slt, %28, %29 : vector<2x128xi32>
    %cst_11 = arith.constant 0xFF800000 : f32
    %31 = vector.broadcast %cst_11 : f32 to vector<2x128xf32>
    %32 = arith.select %30, %27, %31 : vector<2x128xi1>, vector<2x128xf32>
    %cst_12 = arith.constant dense<0xFF800000> : vector<2xf32>
    %33 = vector.multi_reduction <maximumf>, %32, %cst_12 [1] : vector<2x128xf32> to vector<2xf32>
    %34 = vector.shape_cast %33 : vector<2xf32> to vector<2x1xf32>
    %35 = vector.broadcast %34 : vector<2x1xf32> to vector<2x128xf32>
    %36 = arith.subf %32, %35 : vector<2x128xf32>
    %37 = math.exp %36 : vector<2x128xf32>
    %cst_13 = arith.constant dense<0.000000e+00> : vector<2xf32>
    %38 = vector.multi_reduction <add>, %37, %cst_13 [1] : vector<2x128xf32> to vector<2xf32>
    %39 = vector.shape_cast %38 : vector<2xf32> to vector<2x1xf32>
    %40 = vector.broadcast %39 : vector<2x1xf32> to vector<2x128xf32>
    %41 = arith.divf %37, %40 : vector<2x128xf32>
    %c0_14 = arith.constant 0 : index
    %c0_15 = arith.constant 0 : index
    %42 = vector.load %arg4[%c0_14, %c0_15] : memref<128x128xf32, #tpu.memory_space<vmem>>, vector<128x128xf32>
    %cst_16 = arith.constant dense<0.000000e+00> : vector<2x128xf32>
    %43 = tpu.matmul %41, %42, %cst_16 {dimension_numbers = #tpu.dot_dimension_numbers<[1], [0], [0], [1], [0, 0, 1, 1], [], []>} : vector<2x128xf32>, vector<128x128xf32>, vector<2x128xf32> -> vector<2x128xf32>
    %c0_17 = arith.constant 0 : index
    %c0_18 = arith.constant 0 : index
    %44 = vector.load %arg5[%c0_17, %c0_18] : memref<2x128xf32, #tpu.memory_space<vmem>>, vector<2x128xf32>
    tpu.vector_store %arg5[%c0_17, %c0_18], %43 {strides = array<i32>} : memref<2x128xf32, #tpu.memory_space<vmem>>, vector<2x128xf32>,
    return
  }
  func.func @transform_0(%arg0: i32) -> (i32, i32) {
    %c0_i32 = arith.constant 0 : i32
    %c0_i32_0 = arith.constant 0 : i32
    return %arg0, %c0_i32 : i32, i32
  }
  func.func @transform_1(%arg0: i32) -> (i32, i32) {
    %c0_i32 = arith.constant 0 : i32
    %c0_i32_0 = arith.constant 0 : i32
    %c0_i32_1 = arith.constant 0 : i32
    return %c0_i32, %c0_i32_0 : i32, i32
  }
  func.func @transform_2(%arg0: i32) -> (i32, i32) {
    %c0_i32 = arith.constant 0 : i32
    %c0_i32_0 = arith.constant 0 : i32
    %c0_i32_1 = arith.constant 0 : i32
    return %c0_i32, %c0_i32_0 : i32, i32
  }
  func.func @transform_3(%arg0: i32) -> (i32, i32) {
    %c0_i32 = arith.constant 0 : i32
    %c0_i32_0 = arith.constant 0 : i32
    %c0_i32_1 = arith.constant 0 : i32
    return %c0_i32, %c0_i32_0 : i32, i32
  }
  func.func @transform_4(%arg0: i32) -> (i32, i32) {
    %c0_i32 = arith.constant 0 : i32
    %c0_i32_0 = arith.constant 0 : i32
    return %arg0, %c0_i32 : i32, i32
  }
}

</mosaic_0001>

<llo_original>
// kernel: v9_forward.1
$region0: #{v9_forward.1}
  #allocation0 [shape = 'u32[]', space=smem, size = 0x4, offset = 0x4, fixed_abs, tag = 'smem constant byte address 0x4 - core index']
  #allocation1 [shape = 'u32[144,128]{1,0:T(1,128)}', space=vmem, size = 0x12000, scoped, tag = 'internal scratch']
  %s0 = inlined_call_operand.vmem [shape: f32[8,3072], index: 0, kind: input, shape index: {}]
  %s1 = inlined_call_operand.hbm [shape: bf16[3072,128], index: 1, kind: input, shape index: {}]
  %s2 = inlined_call_operand.vmem [shape: bf16[128,128], index: 2, kind: input, shape index: {}]
  %s3 = inlined_call_operand.vmem [shape: f32[128,128], index: 3, kind: input, shape index: {}]
  %s4 = inlined_call_operand.vmem [shape: f32[2,128], index: 4, kind: output, shape index: {}]
  %s5 = sld [smem:[#allocation0]]
  $region30: #{v9_forward.1} parent=0
    _
  %s7 = ssub.s32 1, %s5
  %s8 = scalar_select 0, %s7, %s5
  $region1: #{v9_forward.1} parent=0
    #allocation2 [shape = 'u8[786432]{0}', space=vmem, size = 0xc0000, scoped, tag = 'input window, operand 1, single buffered']
    #allocation3 [shape = 's32[1]{0}', space=sflag, size = 0x4, scoped, tag = 'scoped memory for v9_forward.1']
    %9 = vsyncpa [#allocation3], 0
    // Predicated region
    $region2: #{v9_forward.1} parent=1 // pred_check
      _
    $region3: #{v9_forward.1} parent=1 // pred_check_branch
      %11 = sbr.rel (0) target = $region5
    $region4: #{v9_forward.1} parent=1 // pred_region
      _
    $region5: #{v9_forward.1} parent=1 // pred_fallthru
      _
    // Predicated region
    $region6: #{v9_forward.1} parent=1 // pred_check
      _
    $region7: #{v9_forward.1} parent=1 // pred_check_branch
      %13 = sbr.rel (0) target = $region9
    $region8: #{v9_forward.1} parent=1 // pred_region
      %s15 = ssub.s32 24576, 24576
      %16 = vsyncadd [#allocation3], %s15
      %s17 = sshll.u32 [#allocation2], 4
      %s18 = int_to_ptr.vmem [resolvable:$true] %s17
      %23 = dma.hbm_to_vmem [thread:$0]  %s1, 24576, %s18, [#allocation3], 64, 64, 4
    $region9: #{v9_forward.1} parent=1 // pred_fallthru
      _
    // Predicated region
    $region10: #{v9_forward.1} parent=1 // pred_check
      _
    $region11: #{v9_forward.1} parent=1 // pred_check_branch
      %25 = sbr.rel (0) target = $region13
    $region12: #{v9_forward.1} parent=1 // pred_region
      _
    $region13: #{v9_forward.1} parent=1 // pred_fallthru
      _
    // Predicated region
    $region14: #{v9_forward.1} parent=1 // pred_check
      _
    $region15: #{v9_forward.1} parent=1 // pred_check_branch
      %27 = sbr.rel (0) target = $region17
    $region16: #{v9_forward.1} parent=1 // pred_region
      _
    $region17: #{v9_forward.1} parent=1 // pred_fallthru
      _
    // Predicated region
    $region18: #{v9_forward.1} parent=1 // pred_check
      _
    $region19: #{v9_forward.1} parent=1 // pred_check_branch
      %29 = sbr.rel (0) target = $region21
    $region20: #{v9_forward.1} parent=1 // pred_region
      %30 = dma.done [#allocation3], 24576
    $region21: #{v9_forward.1} parent=1 // pred_fallthru
      _
    %v32 = vld [vmem:[%s0] sm:$0xff]
    %v33 = vld [vmem:[%s0 + $0x8] sm:$0xff]
    %v34 = vld [vmem:[%s0 + $0x10] sm:$0xff]
    %v35 = vld [vmem:[%s0 + $0x18] sm:$0xff]
    %v36 = vld [vmem:[%s0 + $0x20] sm:$0xff]
    %v37 = vld [vmem:[%s0 + $0x28] sm:$0xff]
    %v38 = vld [vmem:[%s0 + $0x30] sm:$0xff]
    %v39 = vld [vmem:[%s0 + $0x38] sm:$0xff]
    %v40 = vld [vmem:[%s0 + $0x40] sm:$0xff]
    %v41 = vld [vmem:[%s0 + $0x48] sm:$0xff]
    %v42 = vld [vmem:[%s0 + $0x50] sm:$0xff]
    %v43 = vld [vmem:[%s0 + $0x58] sm:$0xff]
    %v44 = vld [vmem:[%s0 + $0x60] sm:$0xff]
    %v45 = vld [vmem:[%s0 + $0x68] sm:$0xff]
    %v46 = vld [vmem:[%s0 + $0x70] sm:$0xff]
    %v47 = vld [vmem:[%s0 + $0x78] sm:$0xff]
    %v48 = vld [vmem:[%s0 + $0x80] sm:$0xff]
    %v49 = vld [vmem:[%s0 + $0x88] sm:$0xff]
    %v50 = vld [vmem:[%s0 + $0x90] sm:$0xff]
    %v51 = vld [vmem:[%s0 + $0x98] sm:$0xff]
    %v52 = vld [vmem:[%s0 + $0xa0] sm:$0xff]
    %v53 = vld [vmem:[%s0 + $0xa8] sm:$0xff]
    %v54 = vld [vmem:[%s0 + $0xb0] sm:$0xff]
    %v55 = vld [vmem:[%s0 + $0xb8] sm:$0xff]
    %v56 = vpack.c.bf16 %v32, %v32
    %v57 = vpack.c.bf16 %v33, %v33
    %v58 = vpack.c.bf16 %v34, %v34
    %v59 = vpack.c.bf16 %v35, %v35
    %v60 = vpack.c.bf16 %v36, %v36
    %v61 = vpack.c.bf16 %v37, %v37
    %v62 = vpack.c.bf16 %v38, %v38
    %v63 = vpack.c.bf16 %v39, %v39
    %v64 = vpack.c.bf16 %v40, %v40
    %v65 = vpack.c.bf16 %v41, %v41
    %v66 = vpack.c.bf16 %v42, %v42
    %v67 = vpack.c.bf16 %v43, %v43
    %v68 = vpack.c.bf16 %v44, %v44
    %v69 = vpack.c.bf16 %v45, %v45
    %v70 = vpack.c.bf16 %v46, %v46
    %v71 = vpack.c.bf16 %v47, %v47
    %v72 = vpack.c.bf16 %v48, %v48
    %v73 = vpack.c.bf16 %v49, %v49
    %v74 = vpack.c.bf16 %v50, %v50
    %v75 = vpack.c.bf16 %v51, %v51
    %v76 = vpack.c.bf16 %v52, %v52
    %v77 = vpack.c.bf16 %v53, %v53
    %v78 = vpack.c.bf16 %v54, %v54
    %v79 = vpack.c.bf16 %v55, %v55
    %v80 = vld [vmem:[#allocation2] sm:$0xf]
    %v81 = vld [vmem:[#allocation2 + $0x4] sm:$0xf]
    %v82 = vld [vmem:[#allocation2 + $0x8] sm:$0xf]
    %v83 = vld [vmem:[#allocation2 + $0xc] sm:$0xf]
    %v84 = vld [vmem:[#allocation2 + $0x10] sm:$0xf]
    %v85 = vld [vmem:[#allocation2 + $0x14] sm:$0xf]
    %v86 = vld [vmem:[#allocation2 + $0x18] sm:$0xf]
    %v87 = vld [vmem:[#allocation2 + $0x1c] sm:$0xf]
    %v88 = vld [vmem:[#allocation2 + $0x20] sm:$0xf]
    %v89 = vld [vmem:[#allocation2 + $0x24] sm:$0xf]
    %v90 = vld [vmem:[#allocation2 + $0x28] sm:$0xf]
    %v91 = vld [vmem:[#allocation2 + $0x2c] sm:$0xf]
    %v92 = vld [vmem:[#allocation2 + $0x30] sm:$0xf]
    %v93 = vld [vmem:[#allocation2 + $0x34] sm:$0xf]
    %v94 = vld [vmem:[#allocation2 + $0x38] sm:$0xf]
    %v95 = vld [vmem:[#allocation2 + $0x3c] sm:$0xf]
    %v96 = vld [vmem:[#allocation2 + $0x40] sm:$0xf]
    %v97 = vld [vmem:[#allocation2 + $0x44] sm:$0xf]
    %v98 = vld [vmem:[#allocation2 + $0x48] sm:$0xf]
    %v99 = vld [vmem:[#allocation2 + $0x4c] sm:$0xf]
    %v100 = vld [vmem:[#allocation2 + $0x50] sm:$0xf]
    %v101 = vld [vmem:[#allocation2 + $0x54] sm:$0xf]
    %v102 = vld [vmem:[#allocation2 + $0x58] sm:$0xf]
    %v103 = vld [vmem:[#allocation2 + $0x5c] sm:$0xf]
    %v104 = vld [vmem:[#allocation2 + $0x60] sm:$0xf]
    %v105 = vld [vmem:[#allocation2 + $0x64] sm:$0xf]
    %v106 = vld [vmem:[#allocation2 + $0x68] sm:$0xf]
    %v107 = vld [vmem:[#allocation2 + $0x6c] sm:$0xf]
    %v108 = vld [vmem:[#allocation2 + $0x70] sm:$0xf]
    %v109 = vld [vmem:[#allocation2 + $0x74] sm:$0xf]
    %v110 = vld [vmem:[#allocation2 + $0x78] sm:$0xf]
    %v111 = vld [vmem:[#allocation2 + $0x7c] sm:$0xf]
    %v112 = vld [vmem:[#allocation2 + $0x80] sm:$0xf]
    %v113 = vld [vmem:[#allocation2 + $0x84] sm:$0xf]
    %v114 = vld [vmem:[#allocation2 + $0x88] sm:$0xf]
    %v115 = vld [vmem:[#allocation2 + $0x8c] sm:$0xf]
    %v116 = vld [vmem:[#allocation2 + $0x90] sm:$0xf]
    %v117 = vld [vmem:[#allocation2 + $0x94] sm:$0xf]
    %v118 = vld [vmem:[#allocation2 + $0x98] sm:$0xf]
    %v119 = vld [vmem:[#allocation2 + $0x9c] sm:$0xf]
    %v120 = vld [vmem:[#allocation2 + $0xa0] sm:$0xf]
    %v121 = vld [vmem:[#allocation2 + $0xa4] sm:$0xf]
    %v122 = vld [vmem:[#allocation2 + $0xa8] sm:$0xf]
    %v123 = vld [vmem:[#allocation2 + $0xac] sm:$0xf]
    %v124 = vld [vmem:[#allocation2 + $0xb0] sm:$0xf]
    %v125 = vld [vmem:[#allocation2 + $0xb4] sm:$0xf]
    %v126 = vld [vmem:[#allocation2 + $0xb8] sm:$0xf]
    %v127 = vld [vmem:[#allocation2 + $0xbc] sm:$0xf]
    %v128 = vld [vmem:[#allocation2 + $0xc0] sm:$0xf]
    %v129 = vld [vmem:[#allocation2 + $0xc4] sm:$0xf]
    %v130 = vld [vmem:[#allocation2 + $0xc8] sm:$0xf]
    %v131 = vld [vmem:[#allocation2 + $0xcc] sm:$0xf]
    %v132 = vld [vmem:[#allocation2 + $0xd0] sm:$0xf]
    %v133 = vld [vmem:[#allocation2 + $0xd4] sm:$0xf]
    %v134 = vld [vmem:[#allocation2 + $0xd8] sm:$0xf]
    %v135 = vld [vmem:[#allocation2 + $0xdc] sm:$0xf]
    %v136 = vld [vmem:[#allocation2 + $0xe0] sm:$0xf]
    %v137 = vld [vmem:[#allocation2 + $0xe4] sm:$0xf]
    %v138 = vld [vmem:[#allocation2 + $0xe8] sm:$0xf]
    %v139 = vld [vmem:[#allocation2 + $0xec] sm:$0xf]
    %v140 = vld [vmem:[#allocation2 + $0xf0] sm:$0xf]
    %v141 = vld [vmem:[#allocation2 + $0xf4] sm:$0xf]
    %v142 = vld [vmem:[#allocation2 + $0xf8] sm:$0xf]
    %v143 = vld [vmem:[#allocation2 + $0xfc] sm:$0xf]
    %v144 = vld [vmem:[#allocation2 + $0x100] sm:$0xf]
    %v145 = vld [vmem:[#allocation2 + $0x104] sm:$0xf]
    %v146 = vld [vmem:[#allocation2 + $0x108] sm:$0xf]
    %v147 = vld [vmem:[#allocation2 + $0x10c] sm:$0xf]
    %v148 = vld [vmem:[#allocation2 + $0x110] sm:$0xf]
    %v149 = vld [vmem:[#allocation2 + $0x114] sm:$0xf]
    %v150 = vld [vmem:[#allocation2 + $0x118] sm:$0xf]
    %v151 = vld [vmem:[#allocation2 + $0x11c] sm:$0xf]
    %v152 = vld [vmem:[#allocation2 + $0x120] sm:$0xf]
    %v153 = vld [vmem:[#allocation2 + $0x124] sm:$0xf]
    %v154 = vld [vmem:[#allocation2 + $0x128] sm:$0xf]
    %v155 = vld [vmem:[#allocation2 + $0x12c] sm:$0xf]
    %v156 = vld [vmem:[#allocation2 + $0x130] sm:$0xf]
    %v157 = vld [vmem:[#allocation2 + $0x134] sm:$0xf]
    %v158 = vld [vmem:[#allocation2 + $0x138] sm:$0xf]
    %v159 = vld [vmem:[#allocation2 + $0x13c] sm:$0xf]
    %v160 = vld [vmem:[#allocation2 + $0x140] sm:$0xf]
    %v161 = vld [vmem:[#allocation2 + $0x144] sm:$0xf]
    %v162 = vld [vmem:[#allocation2 + $0x148] sm:$0xf]
    %v163 = vld [vmem:[#allocation2 + $0x14c] sm:$0xf]
    %v164 = vld [vmem:[#allocation2 + $0x150] sm:$0xf]
    %v165 = vld [vmem:[#allocation2 + $0x154] sm:$0xf]
    %v166 = vld [vmem:[#allocation2 + $0x158] sm:$0xf]
    %v167 = vld [vmem:[#allocation2 + $0x15c] sm:$0xf]
    %v168 = vld [vmem:[#allocation2 + $0x160] sm:$0xf]
    %v169 = vld [vmem:[#allocation2 + $0x164] sm:$0xf]
    %v170 = vld [vmem:[#allocation2 + $0x168] sm:$0xf]
    %v171 = vld [vmem:[#allocation2 + $0x16c] sm:$0xf]
    %v172 = vld [vmem:[#allocation2 + $0x170] sm:$0xf]
    %v173 = vld [vmem:[#allocation2 + $0x174] sm:$0xf]
    %v174 = vld [vmem:[#allocation2 + $0x178] sm:$0xf]
    %v175 = vld [vmem:[#allocation2 + $0x17c] sm:$0xf]
    %v176 = vld [vmem:[#allocation2 + $0x180] sm:$0xf]
    %v177 = vld [vmem:[#allocation2 + $0x184] sm:$0xf]
    %v178 = vld [vmem:[#allocation2 + $0x188] sm:$0xf]
    %v179 = vld [vmem:[#allocation2 + $0x18c] sm:$0xf]
    %v180 = vld [vmem:[#allocation2 + $0x190] sm:$0xf]
    %v181 = vld [vmem:[#allocation2 + $0x194] sm:$0xf]
    %v182 = vld [vmem:[#allocation2 + $0x198] sm:$0xf]
    %v183 = vld [vmem:[#allocation2 + $0x19c] sm:$0xf]
    %v184 = vld [vmem:[#allocation2 + $0x1a0] sm:$0xf]
    %v185 = vld [vmem:[#allocation2 + $0x1a4] sm:$0xf]
    %v186 = vld [vmem:[#allocation2 + $0x1a8] sm:$0xf]
    %v187 = vld [vmem:[#allocation2 + $0x1ac] sm:$0xf]
    %v188 = vld [vmem:[#allocation2 + $0x1b0] sm:$0xf]
    %v189 = vld [vmem:[#allocation2 + $0x1b4] sm:$0xf]
    %v190 = vld [vmem:[#allocation2 + $0x1b8] sm:$0xf]
    %v191 = vld [vmem:[#allocation2 + $0x1bc] sm:$0xf]
    %v192 = vld [vmem:[#allocation2 + $0x1c0] sm:$0xf]
    %v193 = vld [vmem:[#allocation2 + $0x1c4] sm:$0xf]
    %v194 = vld [vmem:[#allocation2 + $0x1c8] sm:$0xf]
    %v195 = vld [vmem:[#allocation2 + $0x1cc] sm:$0xf]
    %v196 = vld [vmem:[#allocation2 + $0x1d0] sm:$0xf]
    %v197 = vld [vmem:[#allocation2 + $0x1d4] sm:$0xf]
    %v198 = vld [vmem:[#allocation2 + $0x1d8] sm:$0xf]
    %v199 = vld [vmem:[#allocation2 + $0x1dc] sm:$0xf]
    %v200 = vld [vmem:[#allocation2 + $0x1e0] sm:$0xf]
    %v201 = vld [vmem:[#allocation2 + $0x1e4] sm:$0xf]
    %v202 = vld [vmem:[#allocation2 + $0x1e8] sm:$0xf]
    %v203 = vld [vmem:[#allocation2 + $0x1ec] sm:$0xf]
    %v204 = vld [vmem:[#allocation2 + $0x1f0] sm:$0xf]
    %v205 = vld [vmem:[#allocation2 + $0x1f4] sm:$0xf]
    %v206 = vld [vmem:[#allocation2 + $0x1f8] sm:$0xf]
    %v207 = vld [vmem:[#allocation2 + $0x1fc] sm:$0xf]
    %v208 = vld [vmem:[#allocation2 + $0x200] sm:$0xf]
    %v209 = vld [vmem:[#allocation2 + $0x204] sm:$0xf]
    %v210 = vld [vmem:[#allocation2 + $0x208] sm:$0xf]
    %v211 = vld [vmem:[#allocation2 + $0x20c] sm:$0xf]
    %v212 = vld [vmem:[#allocation2 + $0x210] sm:$0xf]
    %v213 = vld [vmem:[#allocation2 + $0x214] sm:$0xf]
    %v214 = vld [vmem:[#allocation2 + $0x218] sm:$0xf]
    %v215 = vld [vmem:[#allocation2 + $0x21c] sm:$0xf]
    %v216 = vld [vmem:[#allocation2 + $0x220] sm:$0xf]
    %v217 = vld [vmem:[#allocation2 + $0x224] sm:$0xf]
    %v218 = vld [vmem:[#allocation2 + $0x228] sm:$0xf]
    %v219 = vld [vmem:[#allocation2 + $0x22c] sm:$0xf]
    %v220 = vld [vmem:[#allocation2 + $0x230] sm:$0xf]
    %v221 = vld [vmem:[#allocation2 + $0x234] sm:$0xf]
    %v222 = vld [vmem:[#allocation2 + $0x238] sm:$0xf]
    %v223 = vld [vmem:[#allocation2 + $0x23c] sm:$0xf]
    %v224 = vld [vmem:[#allocation2 + $0x240] sm:$0xf]
    %v225 = vld [vmem:[#allocation2 + $0x244] sm:$0xf]
    %v226 = vld [vmem:[#allocation2 + $0x248] sm:$0xf]
    %v227 = vld [vmem:[#allocation2 + $0x24c] sm:$0xf]
    %v228 = vld [vmem:[#allocation2 + $0x250] sm:$0xf]
    %v229 = vld [vmem:[#allocation2 + $0x254] sm:$0xf]
    %v230 = vld [vmem:[#allocation2 + $0x258] sm:$0xf]
    %v231 = vld [vmem:[#allocation2 + $0x25c] sm:$0xf]
    %v232 = vld [vmem:[#allocation2 + $0x260] sm:$0xf]
    %v233 = vld [vmem:[#allocation2 + $0x264] sm:$0xf]
    %v234 = vld [vmem:[#allocation2 + $0x268] sm:$0xf]
    %v235 = vld [vmem:[#allocation2 + $0x26c] sm:$0xf]
    %v236 = vld [vmem:[#allocation2 + $0x270] sm:$0xf]
    %v237 = vld [vmem:[#allocation2 + $0x274] sm:$0xf]
    %v238 = vld [vmem:[#allocation2 + $0x278] sm:$0xf]
    %v239 = vld [vmem:[#allocation2 + $0x27c] sm:$0xf]
    %v240 = vld [vmem:[#allocation2 + $0x280] sm:$0xf]
    %v241 = vld [vmem:[#allocation2 + $0x284] sm:$0xf]
    %v242 = vld [vmem:[#allocation2 + $0x288] sm:$0xf]
    %v243 = vld [vmem:[#allocation2 + $0x28c] sm:$0xf]
    %v244 = vld [vmem:[#allocation2 + $0x290] sm:$0xf]
    %v245 = vld [vmem:[#allocation2 + $0x294] sm:$0xf]
    %v246 = vld [vmem:[#allocation2 + $0x298] sm:$0xf]
    %v247 = vld [vmem:[#allocation2 + $0x29c] sm:$0xf]
    %v248 = vld [vmem:[#allocation2 + $0x2a0] sm:$0xf]
    %v249 = vld [vmem:[#allocation2 + $0x2a4] sm:$0xf]
    %v250 = vld [vmem:[#allocation2 + $0x2a8] sm:$0xf]
    %v251 = vld [vmem:[#allocation2 + $0x2ac] sm:$0xf]
    %v252 = vld [vmem:[#allocation2 + $0x2b0] sm:$0xf]
    %v253 = vld [vmem:[#allocation2 + $0x2b4] sm:$0xf]
    %v254 = vld [vmem:[#allocation2 + $0x2b8] sm:$0xf]
    %v255 = vld [vmem:[#allocation2 + $0x2bc] sm:$0xf]
    %v256 = vld [vmem:[#allocation2 + $0x2c0] sm:$0xf]
    %v257 = vld [vmem:[#allocation2 + $0x2c4] sm:$0xf]
    %v258 = vld [vmem:[#allocation2 + $0x2c8] sm:$0xf]
    %v259 = vld [vmem:[#allocation2 + $0x2cc] sm:$0xf]
    %v260 = vld [vmem:[#allocation2 + $0x2d0] sm:$0xf]
    %v261 = vld [vmem:[#allocation2 + $0x2d4] sm:$0xf]
    %v262 = vld [vmem:[#allocation2 + $0x2d8] sm:$0xf]
    %v263 = vld [vmem:[#allocation2 + $0x2dc] sm:$0xf]
    %v264 = vld [vmem:[#allocation2 + $0x2e0] sm:$0xf]
    %v265 = vld [vmem:[#allocation2 + $0x2e4] sm:$0xf]
    %v266 = vld [vmem:[#allocation2 + $0x2e8] sm:$0xf]
    %v267 = vld [vmem:[#allocation2 + $0x2ec] sm:$0xf]
    %v268 = vld [vmem:[#allocation2 + $0x2f0] sm:$0xf]
    %v269 = vld [vmem:[#allocation2 + $0x2f4] sm:$0xf]
    %v270 = vld [vmem:[#allocation2 + $0x2f8] sm:$0xf]
    %v271 = vld [vmem:[#allocation2 + $0x2fc] sm:$0xf]
    %v272 = vld [vmem:[#allocation2 + $0x300] sm:$0xf]
    %v273 = vld [vmem:[#allocation2 + $0x304] sm:$0xf]
    %v274 = vld [vmem:[#allocation2 + $0x308] sm:$0xf]
    %v275 = vld [vmem:[#allocation2 + $0x30c] sm:$0xf]
    %v276 = vld [vmem:[#allocation2 + $0x310] sm:$0xf]
    %v277 = vld [vmem:[#allocation2 + $0x314] sm:$0xf]
    %v278 = vld [vmem:[#allocation2 + $0x318] sm:$0xf]
    %v279 = vld [vmem:[#allocation2 + $0x31c] sm:$0xf]
    %v280 = vld [vmem:[#allocation2 + $0x320] sm:$0xf]
    %v281 = vld [vmem:[#allocation2 + $0x324] sm:$0xf]
    %v282 = vld [vmem:[#allocation2 + $0x328] sm:$0xf]
    %v283 = vld [vmem:[#allocation2 + $0x32c] sm:$0xf]
    %v284 = vld [vmem:[#allocation2 + $0x330] sm:$0xf]
    %v285 = vld [vmem:[#allocation2 + $0x334] sm:$0xf]
    %v286 = vld [vmem:[#allocation2 + $0x338] sm:$0xf]
    %v287 = vld [vmem:[#allocation2 + $0x33c] sm:$0xf]
    %v288 = vld [vmem:[#allocation2 + $0x340] sm:$0xf]
    %v289 = vld [vmem:[#allocation2 + $0x344] sm:$0xf]
    %v290 = vld [vmem:[#allocation2 + $0x348] sm:$0xf]
    %v291 = vld [vmem:[#allocation2 + $0x34c] sm:$0xf]
    %v292 = vld [vmem:[#allocation2 + $0x350] sm:$0xf]
    %v293 = vld [vmem:[#allocation2 + $0x354] sm:$0xf]
    %v294 = vld [vmem:[#allocation2 + $0x358] sm:$0xf]
    %v295 = vld [vmem:[#allocation2 + $0x35c] sm:$0xf]
    %v296 = vld [vmem:[#allocation2 + $0x360] sm:$0xf]
    %v297 = vld [vmem:[#allocation2 + $0x364] sm:$0xf]
    %v298 = vld [vmem:[#allocation2 + $0x368] sm:$0xf]
    %v299 = vld [vmem:[#allocation2 + $0x36c] sm:$0xf]
    %v300 = vld [vmem:[#allocation2 + $0x370] sm:$0xf]
    %v301 = vld [vmem:[#allocation2 + $0x374] sm:$0xf]
    %v302 = vld [vmem:[#allocation2 + $0x378] sm:$0xf]
    %v303 = vld [vmem:[#allocation2 + $0x37c] sm:$0xf]
    %v304 = vld [vmem:[#allocation2 + $0x380] sm:$0xf]
    %v305 = vld [vmem:[#allocation2 + $0x384] sm:$0xf]
    %v306 = vld [vmem:[#allocation2 + $0x388] sm:$0xf]
    %v307 = vld [vmem:[#allocation2 + $0x38c] sm:$0xf]
    %v308 = vld [vmem:[#allocation2 + $0x390] sm:$0xf]
    %v309 = vld [vmem:[#allocation2 + $0x394] sm:$0xf]
    %v310 = vld [vmem:[#allocation2 + $0x398] sm:$0xf]
    %v311 = vld [vmem:[#allocation2 + $0x39c] sm:$0xf]
    %v312 = vld [vmem:[#allocation2 + $0x3a0] sm:$0xf]
    %v313 = vld [vmem:[#allocation2 + $0x3a4] sm:$0xf]
    %v314 = vld [vmem:[#allocation2 + $0x3a8] sm:$0xf]
    %v315 = vld [vmem:[#allocation2 + $0x3ac] sm:$0xf]
    %v316 = vld [vmem:[#allocation2 + $0x3b0] sm:$0xf]
    %v317 = vld [vmem:[#allocation2 + $0x3b4] sm:$0xf]
    %v318 = vld [vmem:[#allocation2 + $0x3b8] sm:$0xf]
    %v319 = vld [vmem:[#allocation2 + $0x3bc] sm:$0xf]
    %v320 = vld [vmem:[#allocation2 + $0x3c0] sm:$0xf]
    %v321 = vld [vmem:[#allocation2 + $0x3c4] sm:$0xf]
    %v322 = vld [vmem:[#allocation2 + $0x3c8] sm:$0xf]
    %v323 = vld [vmem:[#allocation2 + $0x3cc] sm:$0xf]
    %v324 = vld [vmem:[#allocation2 + $0x3d0] sm:$0xf]
    %v325 = vld [vmem:[#allocation2 + $0x3d4] sm:$0xf]
    %v326 = vld [vmem:[#allocation2 + $0x3d8] sm:$0xf]
    %v327 = vld [vmem:[#allocation2 + $0x3dc] sm:$0xf]
    %v328 = vld [vmem:[#allocation2 + $0x3e0] sm:$0xf]
    %v329 = vld [vmem:[#allocation2 + $0x3e4] sm:$0xf]
    %v330 = vld [vmem:[#allocation2 + $0x3e8] sm:$0xf]
    %v331 = vld [vmem:[#allocation2 + $0x3ec] sm:$0xf]
    %v332 = vld [vmem:[#allocation2 + $0x3f0] sm:$0xf]
    %v333 = vld [vmem:[#allocation2 + $0x3f4] sm:$0xf]
    %v334 = vld [vmem:[#allocation2 + $0x3f8] sm:$0xf]
    %v335 = vld [vmem:[#allocation2 + $0x3fc] sm:$0xf]
    %v336 = vld [vmem:[#allocation2 + $0x400] sm:$0xf]
    %v337 = vld [vmem:[#allocation2 + $0x404] sm:$0xf]
    %v338 = vld [vmem:[#allocation2 + $0x408] sm:$0xf]
    %v339 = vld [vmem:[#allocation2 + $0x40c] sm:$0xf]
    %v340 = vld [vmem:[#allocation2 + $0x410] sm:$0xf]
    %v341 = vld [vmem:[#allocation2 + $0x414] sm:$0xf]
    %v342 = vld [vmem:[#allocation2 + $0x418] sm:$0xf]
    %v343 = vld [vmem:[#allocation2 + $0x41c] sm:$0xf]
    %v344 = vld [vmem:[#allocation2 + $0x420] sm:$0xf]
    %v345 = vld [vmem:[#allocation2 + $0x424] sm:$0xf]
    %v346 = vld [vmem:[#allocation2 + $0x428] sm:$0xf]
    %v347 = vld [vmem:[#allocation2 + $0x42c] sm:$0xf]
    %v348 = vld [vmem:[#allocation2 + $0x430] sm:$0xf]
    %v349 = vld [vmem:[#allocation2 + $0x434] sm:$0xf]
    %v350 = vld [vmem:[#allocation2 + $0x438] sm:$0xf]
    %v351 = vld [vmem:[#allocation2 + $0x43c] sm:$0xf]
    %v352 = vld [vmem:[#allocation2 + $0x440] sm:$0xf]
    %v353 = vld [vmem:[#allocation2 + $0x444] sm:$0xf]
    %v354 = vld [vmem:[#allocation2 + $0x448] sm:$0xf]
    %v355 = vld [vmem:[#allocation2 + $0x44c] sm:$0xf]
    %v356 = vld [vmem:[#allocation2 + $0x450] sm:$0xf]
    %v357 = vld [vmem:[#allocation2 + $0x454] sm:$0xf]
    %v358 = vld [vmem:[#allocation2 + $0x458] sm:$0xf]
    %v359 = vld [vmem:[#allocation2 + $0x45c] sm:$0xf]
    %v360 = vld [vmem:[#allocation2 + $0x460] sm:$0xf]
    %v361 = vld [vmem:[#allocation2 + $0x464] sm:$0xf]
    %v362 = vld [vmem:[#allocation2 + $0x468] sm:$0xf]
    %v363 = vld [vmem:[#allocation2 + $0x46c] sm:$0xf]
    %v364 = vld [vmem:[#allocation2 + $0x470] sm:$0xf]
    %v365 = vld [vmem:[#allocation2 + $0x474] sm:$0xf]
    %v366 = vld [vmem:[#allocation2 + $0x478] sm:$0xf]
    %v367 = vld [vmem:[#allocation2 + $0x47c] sm:$0xf]
    %v368 = vld [vmem:[#allocation2 + $0x480] sm:$0xf]
    %v369 = vld [vmem:[#allocation2 + $0x484] sm:$0xf]
    %v370 = vld [vmem:[#allocation2 + $0x488] sm:$0xf]
    %v371 = vld [vmem:[#allocation2 + $0x48c] sm:$0xf]
    %v372 = vld [vmem:[#allocation2 + $0x490] sm:$0xf]
    %v373 = vld [vmem:[#allocation2 + $0x494] sm:$0xf]
    %v374 = vld [vmem:[#allocation2 + $0x498] sm:$0xf]
    %v375 = vld [vmem:[#allocation2 + $0x49c] sm:$0xf]
    %v376 = vld [vmem:[#allocation2 + $0x4a0] sm:$0xf]
    %v377 = vld [vmem:[#allocation2 + $0x4a4] sm:$0xf]
    %v378 = vld [vmem:[#allocation2 + $0x4a8] sm:$0xf]
    %v379 = vld [vmem:[#allocation2 + $0x4ac] sm:$0xf]
    %v380 = vld [vmem:[#allocation2 + $0x4b0] sm:$0xf]
    %v381 = vld [vmem:[#allocation2 + $0x4b4] sm:$0xf]
    %v382 = vld [vmem:[#allocation2 + $0x4b8] sm:$0xf]
    %v383 = vld [vmem:[#allocation2 + $0x4bc] sm:$0xf]
    %v384 = vld [vmem:[#allocation2 + $0x4c0] sm:$0xf]
    %v385 = vld [vmem:[#allocation2 + $0x4c4] sm:$0xf]
    %v386 = vld [vmem:[#allocation2 + $0x4c8] sm:$0xf]
    %v387 = vld [vmem:[#allocation2 + $0x4cc] sm:$0xf]
    %v388 = vld [vmem:[#allocation2 + $0x4d0] sm:$0xf]
    %v389 = vld [vmem:[#allocation2 + $0x4d4] sm:$0xf]
    %v390 = vld [vmem:[#allocation2 + $0x4d8] sm:$0xf]
    %v391 = vld [vmem:[#allocation2 + $0x4dc] sm:$0xf]
    %v392 = vld [vmem:[#allocation2 + $0x4e0] sm:$0xf]
    %v393 = vld [vmem:[#allocation2 + $0x4e4] sm:$0xf]
    %v394 = vld [vmem:[#allocation2 + $0x4e8] sm:$0xf]
    %v395 = vld [vmem:[#allocation2 + $0x4ec] sm:$0xf]
    %v396 = vld [vmem:[#allocation2 + $0x4f0] sm:$0xf]
    %v397 = vld [vmem:[#allocation2 + $0x4f4] sm:$0xf]
    %v398 = vld [vmem:[#allocation2 + $0x4f8] sm:$0xf]
    %v399 = vld [vmem:[#allocation2 + $0x4fc] sm:$0xf]
    %v400 = vld [vmem:[#allocation2 + $0x500] sm:$0xf]
    %v401 = vld [vmem:[#allocation2 + $0x504] sm:$0xf]
    %v402 = vld [vmem:[#allocation2 + $0x508] sm:$0xf]
    %v403 = vld [vmem:[#allocation2 + $0x50c] sm:$0xf]
    %v404 = vld [vmem:[#allocation2 + $0x510] sm:$0xf]
    %v405 = vld [vmem:[#allocation2 + $0x514] sm:$0xf]
    %v406 = vld [vmem:[#allocation2 + $0x518] sm:$0xf]
    %v407 = vld [vmem:[#allocation2 + $0x51c] sm:$0xf]
    %v408 = vld [vmem:[#allocation2 + $0x520] sm:$0xf]
    %v409 = vld [vmem:[#allocation2 + $0x524] sm:$0xf]
    %v410 = vld [vmem:[#allocation2 + $0x528] sm:$0xf]
    %v411 = vld [vmem:[#allocation2 + $0x52c] sm:$0xf]
    %v412 = vld [vmem:[#allocation2 + $0x530] sm:$0xf]
    %v413 = vld [vmem:[#allocation2 + $0x534] sm:$0xf]
    %v414 = vld [vmem:[#allocation2 + $0x538] sm:$0xf]
    %v415 = vld [vmem:[#allocation2 + $0x53c] sm:$0xf]
    %v416 = vld [vmem:[#allocation2 + $0x540] sm:$0xf]
    %v417 = vld [vmem:[#allocation2 + $0x544] sm:$0xf]
    %v418 = vld [vmem:[#allocation2 + $0x548] sm:$0xf]
    %v419 = vld [vmem:[#allocation2 + $0x54c] sm:$0xf]
    %v420 = vld [vmem:[#allocation2 + $0x550] sm:$0xf]
    %v421 = vld [vmem:[#allocation2 + $0x554] sm:$0xf]
    %v422 = vld [vmem:[#allocation2 + $0x558] sm:$0xf]
    %v423 = vld [vmem:[#allocation2 + $0x55c] sm:$0xf]
    %v424 = vld [vmem:[#allocation2 + $0x560] sm:$0xf]
    %v425 = vld [vmem:[#allocation2 + $0x564] sm:$0xf]
    %v426 = vld [vmem:[#allocation2 + $0x568] sm:$0xf]
    %v427 = vld [vmem:[#allocation2 + $0x56c] sm:$0xf]
    %v428 = vld [vmem:[#allocation2 + $0x570] sm:$0xf]
    %v429 = vld [vmem:[#allocation2 + $0x574] sm:$0xf]
    %v430 = vld [vmem:[#allocation2 + $0x578] sm:$0xf]
    %v431 = vld [vmem:[#allocation2 + $0x57c] sm:$0xf]
    %v432 = vld [vmem:[#allocation2 + $0x580] sm:$0xf]
    %v433 = vld [vmem:[#allocation2 + $0x584] sm:$0xf]
    %v434 = vld [vmem:[#allocation2 + $0x588] sm:$0xf]
    %v435 = vld [vmem:[#allocation2 + $0x58c] sm:$0xf]
    %v436 = vld [vmem:[#allocation2 + $0x590] sm:$0xf]
    %v437 = vld [vmem:[#allocation2 + $0x594] sm:$0xf]
    %v438 = vld [vmem:[#allocation2 + $0x598] sm:$0xf]
    %v439 = vld [vmem:[#allocation2 + $0x59c] sm:$0xf]
    %v440 = vld [vmem:[#allocation2 + $0x5a0] sm:$0xf]
    %v441 = vld [vmem:[#allocation2 + $0x5a4] sm:$0xf]
    %v442 = vld [vmem:[#allocation2 + $0x5a8] sm:$0xf]
    %v443 = vld [vmem:[#allocation2 + $0x5ac] sm:$0xf]
    %v444 = vld [vmem:[#allocation2 + $0x5b0] sm:$0xf]
    %v445 = vld [vmem:[#allocation2 + $0x5b4] sm:$0xf]
    %v446 = vld [vmem:[#allocation2 + $0x5b8] sm:$0xf]
    %v447 = vld [vmem:[#allocation2 + $0x5bc] sm:$0xf]
    %v448 = vld [vmem:[#allocation2 + $0x5c0] sm:$0xf]
    %v449 = vld [vmem:[#allocation2 + $0x5c4] sm:$0xf]
    %v450 = vld [vmem:[#allocation2 + $0x5c8] sm:$0xf]
    %v451 = vld [vmem:[#allocation2 + $0x5cc] sm:$0xf]
    %v452 = vld [vmem:[#allocation2 + $0x5d0] sm:$0xf]
    %v453 = vld [vmem:[#allocation2 + $0x5d4] sm:$0xf]
    %v454 = vld [vmem:[#allocation2 + $0x5d8] sm:$0xf]
    %v455 = vld [vmem:[#allocation2 + $0x5dc] sm:$0xf]
    %v456 = vld [vmem:[#allocation2 + $0x5e0] sm:$0xf]
    %v457 = vld [vmem:[#allocation2 + $0x5e4] sm:$0xf]
    %v458 = vld [vmem:[#allocation2 + $0x5e8] sm:$0xf]
    %v459 = vld [vmem:[#allocation2 + $0x5ec] sm:$0xf]
    %v460 = vld [vmem:[#allocation2 + $0x5f0] sm:$0xf]
    %v461 = vld [vmem:[#allocation2 + $0x5f4] sm:$0xf]
    %v462 = vld [vmem:[#allocation2 + $0x5f8] sm:$0xf]
    %v463 = vld [vmem:[#allocation2 + $0x5fc] sm:$0xf]
    %v848 = vunpack.c.l.b16 %v80
    %v849 = vunpack.c.l.b16 %v81
    %v850 = vunpack.c.l.b16 %v82
    %v851 = vunpack.c.l.b16 %v83
    %v852 = vunpack.c.l.b16 %v84
    %v853 = vunpack.c.l.b16 %v85
    %v854 = vunpack.c.l.b16 %v86
    %v855 = vunpack.c.l.b16 %v87
    %v856 = vunpack.c.l.b16 %v88
    %v857 = vunpack.c.l.b16 %v89
    %v858 = vunpack.c.l.b16 %v90
    %v859 = vunpack.c.l.b16 %v91
    %v860 = vunpack.c.l.b16 %v92
    %v861 = vunpack.c.l.b16 %v93
    %v862 = vunpack.c.l.b16 %v94
    %v863 = vunpack.c.l.b16 %v95
    %v864 = vunpack.c.l.b16 %v96
    %v865 = vunpack.c.l.b16 %v97
    %v866 = vunpack.c.l.b16 %v98
    %v867 = vunpack.c.l.b16 %v99
    %v868 = vunpack.c.l.b16 %v100
    %v869 = vunpack.c.l.b16 %v101
    %v870 = vunpack.c.l.b16 %v102
    %v871 = vunpack.c.l.b16 %v103
    %v872 = vunpack.c.l.b16 %v104
    %v873 = vunpack.c.l.b16 %v105
    %v874 = vunpack.c.l.b16 %v106
    %v875 = vunpack.c.l.b16 %v107
    %v876 = vunpack.c.l.b16 %v108
    %v877 = vunpack.c.l.b16 %v109
    %v878 = vunpack.c.l.b16 %v110
    %v879 = vunpack.c.l.b16 %v111
    %v880 = vunpack.c.l.b16 %v112
    %v881 = vunpack.c.l.b16 %v113
    %v882 = vunpack.c.l.b16 %v114
    %v883 = vunpack.c.l.b16 %v115
    %v884 = vunpack.c.l.b16 %v116
    %v885 = vunpack.c.l.b16 %v117
    %v886 = vunpack.c.l.b16 %v118
    %v887 = vunpack.c.l.b16 %v119
    %v888 = vunpack.c.l.b16 %v120
    %v889 = vunpack.c.l.b16 %v121
    %v890 = vunpack.c.l.b16 %v122
    %v891 = vunpack.c.l.b16 %v123
    %v892 = vunpack.c.l.b16 %v124
    %v893 = vunpack.c.l.b16 %v125
    %v894 = vunpack.c.l.b16 %v126
    %v895 = vunpack.c.l.b16 %v127
    %v896 = vunpack.c.l.b16 %v128
    %v897 = vunpack.c.l.b16 %v129
    %v898 = vunpack.c.l.b16 %v130
    %v899 = vunpack.c.l.b16 %v131
    %v900 = vunpack.c.l.b16 %v132
    %v901 = vunpack.c.l.b16 %v133
    %v902 = vunpack.c.l.b16 %v134
    %v903 = vunpack.c.l.b16 %v135
    %v904 = vunpack.c.l.b16 %v136
    %v905 = vunpack.c.l.b16 %v137
    %v906 = vunpack.c.l.b16 %v138
    %v907 = vunpack.c.l.b16 %v139
    %v908 = vunpack.c.l.b16 %v140
    %v909 = vunpack.c.l.b16 %v141
    %v910 = vunpack.c.l.b16 %v142
    %v911 = vunpack.c.l.b16 %v143
    %v912 = vunpack.c.l.b16 %v144
    %v913 = vunpack.c.l.b16 %v145
    %v914 = vunpack.c.l.b16 %v146
    %v915 = vunpack.c.l.b16 %v147
    %v916 = vunpack.c.l.b16 %v148
    %v917 = vunpack.c.l.b16 %v149
    %v918 = vunpack.c.l.b16 %v150
    %v919 = vunpack.c.l.b16 %v151
    %v920 = vunpack.c.l.b16 %v152
    %v921 = vunpack.c.l.b16 %v153
    %v922 = vunpack.c.l.b16 %v154
    %v923 = vunpack.c.l.b16 %v155
    %v924 = vunpack.c.l.b16 %v156
    %v925 = vunpack.c.l.b16 %v157
    %v926 = vunpack.c.l.b16 %v158
    %v927 = vunpack.c.l.b16 %v159
    %v928 = vunpack.c.l.b16 %v160
    %v929 = vunpack.c.l.b16 %v161
    %v930 = vunpack.c.l.b16 %v162
    %v931 = vunpack.c.l.b16 %v163
    %v932 = vunpack.c.l.b16 %v164
    %v933 = vunpack.c.l.b16 %v165
    %v934 = vunpack.c.l.b16 %v166
    %v935 = vunpack.c.l.b16 %v167
    %v936 = vunpack.c.l.b16 %v168
    %v937 = vunpack.c.l.b16 %v169
    %v938 = vunpack.c.l.b16 %v170
    %v939 = vunpack.c.l.b16 %v171
    %v940 = vunpack.c.l.b16 %v172
    %v941 = vunpack.c.l.b16 %v173
    %v942 = vunpack.c.l.b16 %v174
    %v943 = vunpack.c.l.b16 %v175
    %v944 = vunpack.c.l.b16 %v176
    %v945 = vunpack.c.l.b16 %v177
    %v946 = vunpack.c.l.b16 %v178
    %v947 = vunpack.c.l.b16 %v179
    %v948 = vunpack.c.l.b16 %v180
    %v949 = vunpack.c.l.b16 %v181
    %v950 = vunpack.c.l.b16 %v182
    %v951 = vunpack.c.l.b16 %v183
    %v952 = vunpack.c.l.b16 %v184
    %v953 = vunpack.c.l.b16 %v185
    %v954 = vunpack.c.l.b16 %v186
    %v955 = vunpack.c.l.b16 %v187
    %v956 = vunpack.c.l.b16 %v188
    %v957 = vunpack.c.l.b16 %v189
    %v958 = vunpack.c.l.b16 %v190
    %v959 = vunpack.c.l.b16 %v191
    %v960 = vunpack.c.l.b16 %v192
    %v961 = vunpack.c.l.b16 %v193
    %v962 = vunpack.c.l.b16 %v194
    %v963 = vunpack.c.l.b16 %v195
    %v964 = vunpack.c.l.b16 %v196
    %v965 = vunpack.c.l.b16 %v197
    %v966 = vunpack.c.l.b16 %v198
    %v967 = vunpack.c.l.b16 %v199
    %v968 = vunpack.c.l.b16 %v200
    %v969 = vunpack.c.l.b16 %v201
    %v970 = vunpack.c.l.b16 %v202
    %v971 = vunpack.c.l.b16 %v203
    %v972 = vunpack.c.l.b16 %v204
    %v973 = vunpack.c.l.b16 %v205
    %v974 = vunpack.c.l.b16 %v206
    %v975 = vunpack.c.l.b16 %v207
    %v976 = vunpack.c.l.b16 %v208
    %v977 = vunpack.c.l.b16 %v209
    %v978 = vunpack.c.l.b16 %v210
    %v979 = vunpack.c.l.b16 %v211
    %v980 = vunpack.c.l.b16 %v212
    %v981 = vunpack.c.l.b16 %v213
    %v982 = vunpack.c.l.b16 %v214
    %v983 = vunpack.c.l.b16 %v215
    %v984 = vunpack.c.l.b16 %v216
    %v985 = vunpack.c.l.b16 %v217
    %v986 = vunpack.c.l.b16 %v218
    %v987 = vunpack.c.l.b16 %v219
    %v988 = vunpack.c.l.b16 %v220
    %v989 = vunpack.c.l.b16 %v221
    %v990 = vunpack.c.l.b16 %v222
    %v991 = vunpack.c.l.b16 %v223
    %v992 = vunpack.c.l.b16 %v224
    %v993 = vunpack.c.l.b16 %v225
    %v994 = vunpack.c.l.b16 %v226
    %v995 = vunpack.c.l.b16 %v227
    %v996 = vunpack.c.l.b16 %v228
    %v997 = vunpack.c.l.b16 %v229
    %v998 = vunpack.c.l.b16 %v230
    %v999 = vunpack.c.l.b16 %v231
    %v1000 = vunpack.c.l.b16 %v232
    %v1001 = vunpack.c.l.b16 %v233
    %v1002 = vunpack.c.l.b16 %v234
    %v1003 = vunpack.c.l.b16 %v235
    %v1004 = vunpack.c.l.b16 %v236
    %v1005 = vunpack.c.l.b16 %v237
    %v1006 = vunpack.c.l.b16 %v238
    %v1007 = vunpack.c.l.b16 %v239
    %v1008 = vunpack.c.l.b16 %v240
    %v1009 = vunpack.c.l.b16 %v241
    %v1010 = vunpack.c.l.b16 %v242
    %v1011 = vunpack.c.l.b16 %v243
    %v1012 = vunpack.c.l.b16 %v244
    %v1013 = vunpack.c.l.b16 %v245
    %v1014 = vunpack.c.l.b16 %v246
    %v1015 = vunpack.c.l.b16 %v247
    %v1016 = vunpack.c.l.b16 %v248
    %v1017 = vunpack.c.l.b16 %v249
    %v1018 = vunpack.c.l.b16 %v250
    %v1019 = vunpack.c.l.b16 %v251
    %v1020 = vunpack.c.l.b16 %v252
    %v1021 = vunpack.c.l.b16 %v253
    %v1022 = vunpack.c.l.b16 %v254
    %v1023 = vunpack.c.l.b16 %v255
    %v1024 = vunpack.c.l.b16 %v256
    %v1025 = vunpack.c.l.b16 %v257
    %v1026 = vunpack.c.l.b16 %v258
    %v1027 = vunpack.c.l.b16 %v259
    %v1028 = vunpack.c.l.b16 %v260
    %v1029 = vunpack.c.l.b16 %v261
    %v1030 = vunpack.c.l.b16 %v262
    %v1031 = vunpack.c.l.b16 %v263
    %v1032 = vunpack.c.l.b16 %v264
    %v1033 = vunpack.c.l.b16 %v265
    %v1034 = vunpack.c.l.b16 %v266
    %v1035 = vunpack.c.l.b16 %v267
    %v1036 = vunpack.c.l.b16 %v268
    %v1037 = vunpack.c.l.b16 %v269
    %v1038 = vunpack.c.l.b16 %v270
    %v1039 = vunpack.c.l.b16 %v271
    %v1040 = vunpack.c.l.b16 %v272
    %v1041 = vunpack.c.l.b16 %v273
    %v1042 = vunpack.c.l.b16 %v274
    %v1043 = vunpack.c.l.b16 %v275
    %v1044 = vunpack.c.l.b16 %v276
    %v1045 = vunpack.c.l.b16 %v277
    %v1046 = vunpack.c.l.b16 %v278
    %v1047 = vunpack.c.l.b16 %v279
    %v1048 = vunpack.c.l.b16 %v280
    %v1049 = vunpack.c.l.b16 %v281
    %v1050 = vunpack.c.l.b16 %v282
    %v1051 = vunpack.c.l.b16 %v283
    %v1052 = vunpack.c.l.b16 %v284
    %v1053 = vunpack.c.l.b16 %v285
    %v1054 = vunpack.c.l.b16 %v286
    %v1055 = vunpack.c.l.b16 %v287
    %v1056 = vunpack.c.l.b16 %v288
    %v1057 = vunpack.c.l.b16 %v289
    %v1058 = vunpack.c.l.b16 %v290
    %v1059 = vunpack.c.l.b16 %v291
    %v1060 = vunpack.c.l.b16 %v292
    %v1061 = vunpack.c.l.b16 %v293
    %v1062 = vunpack.c.l.b16 %v294
    %v1063 = vunpack.c.l.b16 %v295
    %v1064 = vunpack.c.l.b16 %v296
    %v1065 = vunpack.c.l.b16 %v297
    %v1066 = vunpack.c.l.b16 %v298
    %v1067 = vunpack.c.l.b16 %v299
    %v1068 = vunpack.c.l.b16 %v300
    %v1069 = vunpack.c.l.b16 %v301
    %v1070 = vunpack.c.l.b16 %v302
    %v1071 = vunpack.c.l.b16 %v303
    %v1072 = vunpack.c.l.b16 %v304
    %v1073 = vunpack.c.l.b16 %v305
    %v1074 = vunpack.c.l.b16 %v306
    %v1075 = vunpack.c.l.b16 %v307
    %v1076 = vunpack.c.l.b16 %v308
    %v1077 = vunpack.c.l.b16 %v309
    %v1078 = vunpack.c.l.b16 %v310
    %v1079 = vunpack.c.l.b16 %v311
    %v1080 = vunpack.c.l.b16 %v312
    %v1081 = vunpack.c.l.b16 %v313
    %v1082 = vunpack.c.l.b16 %v314
    %v1083 = vunpack.c.l.b16 %v315
    %v1084 = vunpack.c.l.b16 %v316
    %v1085 = vunpack.c.l.b16 %v317
    %v1086 = vunpack.c.l.b16 %v318
    %v1087 = vunpack.c.l.b16 %v319
    %v1088 = vunpack.c.l.b16 %v320
    %v1089 = vunpack.c.l.b16 %v321
    %v1090 = vunpack.c.l.b16 %v322
    %v1091 = vunpack.c.l.b16 %v323
    %v1092 = vunpack.c.l.b16 %v324
    %v1093 = vunpack.c.l.b16 %v325
    %v1094 = vunpack.c.l.b16 %v326
    %v1095 = vunpack.c.l.b16 %v327
    %v1096 = vunpack.c.l.b16 %v328
    %v1097 = vunpack.c.l.b16 %v329
    %v1098 = vunpack.c.l.b16 %v330
    %v1099 = vunpack.c.l.b16 %v331
    %v1100 = vunpack.c.l.b16 %v332
    %v1101 = vunpack.c.l.b16 %v333
    %v1102 = vunpack.c.l.b16 %v334
    %v1103 = vunpack.c.l.b16 %v335
    %v1104 = vunpack.c.l.b16 %v336
    %v1105 = vunpack.c.l.b16 %v337
    %v1106 = vunpack.c.l.b16 %v338
    %v1107 = vunpack.c.l.b16 %v339
    %v1108 = vunpack.c.l.b16 %v340
    %v1109 = vunpack.c.l.b16 %v341
    %v1110 = vunpack.c.l.b16 %v342
    %v1111 = vunpack.c.l.b16 %v343
    %v1112 = vunpack.c.l.b16 %v344
    %v1113 = vunpack.c.l.b16 %v345
    %v1114 = vunpack.c.l.b16 %v346
    %v1115 = vunpack.c.l.b16 %v347
    %v1116 = vunpack.c.l.b16 %v348
    %v1117 = vunpack.c.l.b16 %v349
    %v1118 = vunpack.c.l.b16 %v350
    %v1119 = vunpack.c.l.b16 %v351
    %v1120 = vunpack.c.l.b16 %v352
    %v1121 = vunpack.c.l.b16 %v353
    %v1122 = vunpack.c.l.b16 %v354
    %v1123 = vunpack.c.l.b16 %v355
    %v1124 = vunpack.c.l.b16 %v356
    %v1125 = vunpack.c.l.b16 %v357
    %v1126 = vunpack.c.l.b16 %v358
    %v1127 = vunpack.c.l.b16 %v359
    %v1128 = vunpack.c.l.b16 %v360
    %v1129 = vunpack.c.l.b16 %v361
    %v1130 = vunpack.c.l.b16 %v362
    %v1131 = vunpack.c.l.b16 %v363
    %v1132 = vunpack.c.l.b16 %v364
    %v1133 = vunpack.c.l.b16 %v365
    %v1134 = vunpack.c.l.b16 %v366
    %v1135 = vunpack.c.l.b16 %v367
    %v1136 = vunpack.c.l.b16 %v368
    %v1137 = vunpack.c.l.b16 %v369
    %v1138 = vunpack.c.l.b16 %v370
    %v1139 = vunpack.c.l.b16 %v371
    %v1140 = vunpack.c.l.b16 %v372
    %v1141 = vunpack.c.l.b16 %v373
    %v1142 = vunpack.c.l.b16 %v374
    %v1143 = vunpack.c.l.b16 %v375
    %v1144 = vunpack.c.l.b16 %v376
    %v1145 = vunpack.c.l.b16 %v377
    %v1146 = vunpack.c.l.b16 %v378
    %v1147 = vunpack.c.l.b16 %v379
    %v1148 = vunpack.c.l.b16 %v380
    %v1149 = vunpack.c.l.b16 %v381
    %v1150 = vunpack.c.l.b16 %v382
    %v1151 = vunpack.c.l.b16 %v383
    %v1152 = vunpack.c.l.b16 %v384
    %v1153 = vunpack.c.l.b16 %v385
    %v1154 = vunpack.c.l.b16 %v386
    %v1155 = vunpack.c.l.b16 %v387
    %v1156 = vunpack.c.l.b16 %v388
    %v1157 = vunpack.c.l.b16 %v389
    %v1158 = vunpack.c.l.b16 %v390
    %v1159 = vunpack.c.l.b16 %v391
    %v1160 = vunpack.c.l.b16 %v392
    %v1161 = vunpack.c.l.b16 %v393
    %v1162 = vunpack.c.l.b16 %v394
    %v1163 = vunpack.c.l.b16 %v395
    %v1164 = vunpack.c.l.b16 %v396
    %v1165 = vunpack.c.l.b16 %v397
    %v1166 = vunpack.c.l.b16 %v398
    %v1167 = vunpack.c.l.b16 %v399
    %v1168 = vunpack.c.l.b16 %v400
    %v1169 = vunpack.c.l.b16 %v401
    %v1170 = vunpack.c.l.b16 %v402
    %v1171 = vunpack.c.l.b16 %v403
    %v1172 = vunpack.c.l.b16 %v404
    %v1173 = vunpack.c.l.b16 %v405
    %v1174 = vunpack.c.l.b16 %v406
    %v1175 = vunpack.c.l.b16 %v407
    %v1176 = vunpack.c.l.b16 %v408
    %v1177 = vunpack.c.l.b16 %v409
    %v1178 = vunpack.c.l.b16 %v410
    %v1179 = vunpack.c.l.b16 %v411
    %v1180 = vunpack.c.l.b16 %v412
    %v1181 = vunpack.c.l.b16 %v413
    %v1182 = vunpack.c.l.b16 %v414
    %v1183 = vunpack.c.l.b16 %v415
    %v1184 = vunpack.c.l.b16 %v416
    %v1185 = vunpack.c.l.b16 %v417
    %v1186 = vunpack.c.l.b16 %v418
    %v1187 = vunpack.c.l.b16 %v419
    %v1188 = vunpack.c.l.b16 %v420
    %v1189 = vunpack.c.l.b16 %v421
    %v1190 = vunpack.c.l.b16 %v422
    %v1191 = vunpack.c.l.b16 %v423
    %v1192 = vunpack.c.l.b16 %v424
    %v1193 = vunpack.c.l.b16 %v425
    %v1194 = vunpack.c.l.b16 %v426
    %v1195 = vunpack.c.l.b16 %v427
    %v1196 = vunpack.c.l.b16 %v428
    %v1197 = vunpack.c.l.b16 %v429
    %v1198 = vunpack.c.l.b16 %v430
    %v1199 = vunpack.c.l.b16 %v431
    %v1200 = vunpack.c.l.b16 %v432
    %v1201 = vunpack.c.l.b16 %v433
    %v1202 = vunpack.c.l.b16 %v434
    %v1203 = vunpack.c.l.b16 %v435
    %v1204 = vunpack.c.l.b16 %v436
    %v1205 = vunpack.c.l.b16 %v437
    %v1206 = vunpack.c.l.b16 %v438
    %v1207 = vunpack.c.l.b16 %v439
    %v1208 = vunpack.c.l.b16 %v440
    %v1209 = vunpack.c.l.b16 %v441
    %v1210 = vunpack.c.l.b16 %v442
    %v1211 = vunpack.c.l.b16 %v443
    %v1212 = vunpack.c.l.b16 %v444
    %v1213 = vunpack.c.l.b16 %v445
    %v1214 = vunpack.c.l.b16 %v446
    %v1215 = vunpack.c.l.b16 %v447
    %v1216 = vunpack.c.l.b16 %v448
    %v1217 = vunpack.c.l.b16 %v449
    %v1218 = vunpack.c.l.b16 %v450
    %v1219 = vunpack.c.l.b16 %v451
    %v1220 = vunpack.c.l.b16 %v452
    %v1221 = vunpack.c.l.b16 %v453
    %v1222 = vunpack.c.l.b16 %v454
    %v1223 = vunpack.c.l.b16 %v455
    %v1224 = vunpack.c.l.b16 %v456
    %v1225 = vunpack.c.l.b16 %v457
    %v1226 = vunpack.c.l.b16 %v458
    %v1227 = vunpack.c.l.b16 %v459
    %v1228 = vunpack.c.l.b16 %v460
    %v1229 = vunpack.c.l.b16 %v461
    %v1230 = vunpack.c.l.b16 %v462
    %v1231 = vunpack.c.l.b16 %v463
    %v1232 = vpack.c.b16 %v849, %v848
    %v1233 = vpack.c.b16 %v851, %v850
    %v1234 = vpack.c.b16 %v853, %v852
    %v1235 = vpack.c.b16 %v855, %v854
    %v1236 = vpack.c.b16 %v857, %v856
    %v1237 = vpack.c.b16 %v859, %v858
    %v1238 = vpack.c.b16 %v861, %v860
    %v1239 = vpack.c.b16 %v863, %v862
    %v1240 = vpack.c.b16 %v865, %v864
    %v1241 = vpack.c.b16 %v867, %v866
    %v1242 = vpack.c.b16 %v869, %v868
    %v1243 = vpack.c.b16 %v871, %v870
    %v1244 = vpack.c.b16 %v873, %v872
    %v1245 = vpack.c.b16 %v875, %v874
    %v1246 = vpack.c.b16 %v877, %v876
    %v1247 = vpack.c.b16 %v879, %v878
    %v1248 = vpack.c.b16 %v881, %v880
    %v1249 = vpack.c.b16 %v883, %v882
    %v1250 = vpack.c.b16 %v885, %v884
    %v1251 = vpack.c.b16 %v887, %v886
    %v1252 = vpack.c.b16 %v889, %v888
    %v1253 = vpack.c.b16 %v891, %v890
    %v1254 = vpack.c.b16 %v893, %v892
    %v1255 = vpack.c.b16 %v895, %v894
    %v1256 = vpack.c.b16 %v897, %v896
    %v1257 = vpack.c.b16 %v899, %v898
    %v1258 = vpack.c.b16 %v901, %v900
    %v1259 = vpack.c.b16 %v903, %v902
    %v1260 = vpack.c.b16 %v905, %v904
    %v1261 = vpack.c.b16 %v907, %v906
    %v1262 = vpack.c.b16 %v909, %v908
    %v1263 = vpack.c.b16 %v911, %v910
    %v1264 = vpack.c.b16 %v913, %v912
    %v1265 = vpack.c.b16 %v915, %v914
    %v1266 = vpack.c.b16 %v917, %v916
    %v1267 = vpack.c.b16 %v919, %v918
    %v1268 = vpack.c.b16 %v921, %v920
    %v1269 = vpack.c.b16 %v923, %v922
    %v1270 = vpack.c.b16 %v925, %v924
    %v1271 = vpack.c.b16 %v927, %v926
    %v1272 = vpack.c.b16 %v929, %v928
    %v1273 = vpack.c.b16 %v931, %v930
    %v1274 = vpack.c.b16 %v933, %v932
    %v1275 = vpack.c.b16 %v935, %v934
    %v1276 = vpack.c.b16 %v937, %v936
    %v1277 = vpack.c.b16 %v939, %v938
    %v1278 = vpack.c.b16 %v941, %v940
    %v1279 = vpack.c.b16 %v943, %v942
    %v1280 = vpack.c.b16 %v945, %v944
    %v1281 = vpack.c.b16 %v947, %v946
    %v1282 = vpack.c.b16 %v949, %v948
    %v1283 = vpack.c.b16 %v951, %v950
    %v1284 = vpack.c.b16 %v953, %v952
    %v1285 = vpack.c.b16 %v955, %v954
    %v1286 = vpack.c.b16 %v957, %v956
    %v1287 = vpack.c.b16 %v959, %v958
    %v1288 = vpack.c.b16 %v961, %v960
    %v1289 = vpack.c.b16 %v963, %v962
    %v1290 = vpack.c.b16 %v965, %v964
    %v1291 = vpack.c.b16 %v967, %v966
    %v1292 = vpack.c.b16 %v969, %v968
    %v1293 = vpack.c.b16 %v971, %v970
    %v1294 = vpack.c.b16 %v973, %v972
    %v1295 = vpack.c.b16 %v975, %v974
    %v1296 = vpack.c.b16 %v977, %v976
    %v1297 = vpack.c.b16 %v979, %v978
    %v1298 = vpack.c.b16 %v981, %v980
    %v1299 = vpack.c.b16 %v983, %v982
    %v1300 = vpack.c.b16 %v985, %v984
    %v1301 = vpack.c.b16 %v987, %v986
    %v1302 = vpack.c.b16 %v989, %v988
    %v1303 = vpack.c.b16 %v991, %v990
    %v1304 = vpack.c.b16 %v993, %v992
    %v1305 = vpack.c.b16 %v995, %v994
    %v1306 = vpack.c.b16 %v997, %v996
    %v1307 = vpack.c.b16 %v999, %v998
    %v1308 = vpack.c.b16 %v1001, %v1000
    %v1309 = vpack.c.b16 %v1003, %v1002
    %v1310 = vpack.c.b16 %v1005, %v1004
    %v1311 = vpack.c.b16 %v1007, %v1006
    %v1312 = vpack.c.b16 %v1009, %v1008
    %v1313 = vpack.c.b16 %v1011, %v1010
    %v1314 = vpack.c.b16 %v1013, %v1012
    %v1315 = vpack.c.b16 %v1015, %v1014
    %v1316 = vpack.c.b16 %v1017, %v1016
    %v1317 = vpack.c.b16 %v1019, %v1018
    %v1318 = vpack.c.b16 %v1021, %v1020
    %v1319 = vpack.c.b16 %v1023, %v1022
    %v1320 = vpack.c.b16 %v1025, %v1024
    %v1321 = vpack.c.b16 %v1027, %v1026
    %v1322 = vpack.c.b16 %v1029, %v1028
    %v1323 = vpack.c.b16 %v1031, %v1030
    %v1324 = vpack.c.b16 %v1033, %v1032
    %v1325 = vpack.c.b16 %v1035, %v1034
    %v1326 = vpack.c.b16 %v1037, %v1036
    %v1327 = vpack.c.b16 %v1039, %v1038
    %v1328 = vpack.c.b16 %v1041, %v1040
    %v1329 = vpack.c.b16 %v1043, %v1042
    %v1330 = vpack.c.b16 %v1045, %v1044
    %v1331 = vpack.c.b16 %v1047, %v1046
    %v1332 = vpack.c.b16 %v1049, %v1048
    %v1333 = vpack.c.b16 %v1051, %v1050
    %v1334 = vpack.c.b16 %v1053, %v1052
    %v1335 = vpack.c.b16 %v1055, %v1054
    %v1336 = vpack.c.b16 %v1057, %v1056
    %v1337 = vpack.c.b16 %v1059, %v1058
    %v1338 = vpack.c.b16 %v1061, %v1060
    %v1339 = vpack.c.b16 %v1063, %v1062
    %v1340 = vpack.c.b16 %v1065, %v1064
    %v1341 = vpack.c.b16 %v1067, %v1066
    %v1342 = vpack.c.b16 %v1069, %v1068
    %v1343 = vpack.c.b16 %v1071, %v1070
    %v1344 = vpack.c.b16 %v1073, %v1072
    %v1345 = vpack.c.b16 %v1075, %v1074
    %v1346 = vpack.c.b16 %v1077, %v1076
    %v1347 = vpack.c.b16 %v1079, %v1078
    %v1348 = vpack.c.b16 %v1081, %v1080
    %v1349 = vpack.c.b16 %v1083, %v1082
    %v1350 = vpack.c.b16 %v1085, %v1084
    %v1351 = vpack.c.b16 %v1087, %v1086
    %v1352 = vpack.c.b16 %v1089, %v1088
    %v1353 = vpack.c.b16 %v1091, %v1090
    %v1354 = vpack.c.b16 %v1093, %v1092
    %v1355 = vpack.c.b16 %v1095, %v1094
    %v1356 = vpack.c.b16 %v1097, %v1096
    %v1357 = vpack.c.b16 %v1099, %v1098
    %v1358 = vpack.c.b16 %v1101, %v1100
    %v1359 = vpack.c.b16 %v1103, %v1102
    %v1360 = vpack.c.b16 %v1105, %v1104
    %v1361 = vpack.c.b16 %v1107, %v1106
    %v1362 = vpack.c.b16 %v1109, %v1108
    %v1363 = vpack.c.b16 %v1111, %v1110
    %v1364 = vpack.c.b16 %v1113, %v1112
    %v1365 = vpack.c.b16 %v1115, %v1114
    %v1366 = vpack.c.b16 %v1117, %v1116
    %v1367 = vpack.c.b16 %v1119, %v1118
    %v1368 = vpack.c.b16 %v1121, %v1120
    %v1369 = vpack.c.b16 %v1123, %v1122
    %v1370 = vpack.c.b16 %v1125, %v1124
    %v1371 = vpack.c.b16 %v1127, %v1126
    %v1372 = vpack.c.b16 %v1129, %v1128
    %v1373 = vpack.c.b16 %v1131, %v1130
    %v1374 = vpack.c.b16 %v1133, %v1132
    %v1375 = vpack.c.b16 %v1135, %v1134
    %v1376 = vpack.c.b16 %v1137, %v1136
    %v1377 = vpack.c.b16 %v1139, %v1138
    %v1378 = vpack.c.b16 %v1141, %v1140
    %v1379 = vpack.c.b16 %v1143, %v1142
    %v1380 = vpack.c.b16 %v1145, %v1144
    %v1381 = vpack.c.b16 %v1147, %v1146
    %v1382 = vpack.c.b16 %v1149, %v1148
    %v1383 = vpack.c.b16 %v1151, %v1150
    %v1384 = vpack.c.b16 %v1153, %v1152
    %v1385 = vpack.c.b16 %v1155, %v1154
    %v1386 = vpack.c.b16 %v1157, %v1156
    %v1387 = vpack.c.b16 %v1159, %v1158
    %v1388 = vpack.c.b16 %v1161, %v1160
    %v1389 = vpack.c.b16 %v1163, %v1162
    %v1390 = vpack.c.b16 %v1165, %v1164
    %v1391 = vpack.c.b16 %v1167, %v1166
    %v1392 = vpack.c.b16 %v1169, %v1168
    %v1393 = vpack.c.b16 %v1171, %v1170
    %v1394 = vpack.c.b16 %v1173, %v1172
    %v1395 = vpack.c.b16 %v1175, %v1174
    %v1396 = vpack.c.b16 %v1177, %v1176
    %v1397 = vpack.c.b16 %v1179, %v1178
    %v1398 = vpack.c.b16 %v1181, %v1180
    %v1399 = vpack.c.b16 %v1183, %v1182
    %v1400 = vpack.c.b16 %v1185, %v1184
    %v1401 = vpack.c.b16 %v1187, %v1186
    %v1402 = vpack.c.b16 %v1189, %v1188
    %v1403 = vpack.c.b16 %v1191, %v1190
    %v1404 = vpack.c.b16 %v1193, %v1192
    %v1405 = vpack.c.b16 %v1195, %v1194
    %v1406 = vpack.c.b16 %v1197, %v1196
    %v1407 = vpack.c.b16 %v1199, %v1198
    %v1408 = vpack.c.b16 %v1201, %v1200
    %v1409 = vpack.c.b16 %v1203, %v1202
    %v1410 = vpack.c.b16 %v1205, %v1204
    %v1411 = vpack.c.b16 %v1207, %v1206
    %v1412 = vpack.c.b16 %v1209, %v1208
    %v1413 = vpack.c.b16 %v1211, %v1210
    %v1414 = vpack.c.b16 %v1213, %v1212
    %v1415 = vpack.c.b16 %v1215, %v1214
    %v1416 = vpack.c.b16 %v1217, %v1216
    %v1417 = vpack.c.b16 %v1219, %v1218
    %v1418 = vpack.c.b16 %v1221, %v1220
    %v1419 = vpack.c.b16 %v1223, %v1222
    %v1420 = vpack.c.b16 %v1225, %v1224
    %v1421 = vpack.c.b16 %v1227, %v1226
    %v1422 = vpack.c.b16 %v1229, %v1228
    %v1423 = vpack.c.b16 %v1231, %v1230
    %1616 = vmatprep.subr.bf16.mxu0 0
    %1617 = vmatpush1.bf16.msra.mxu0 %v1232
    %1618 = vmatprep.subr.bf16.mxu0 0
    %1619 = vmatpush1.bf16.msra.mxu0 %v1233
    %1620 = vmatprep.subr.bf16.mxu0 0
    %1621 = vmatpush1.bf16.msra.mxu0 %v1234
    %1622 = vmatprep.subr.bf16.mxu0 0
    %1623 = vmatpush1.bf16.msra.mxu0 %v1235
    %1624 = vmatprep.subr.bf16.mxu0 0
    %1625 = vmatpush1.bf16.msra.mxu0 %v1236
    %1626 = vmatprep.subr.bf16.mxu0 0
    %1627 = vmatpush1.bf16.msra.mxu0 %v1237
    %1628 = vmatprep.subr.bf16.mxu0 0
    %1629 = vmatpush1.bf16.msra.mxu0 %v1238
    %1630 = vmatprep.subr.bf16.mxu0 0
    %1631 = vmatpush1.bf16.msra.mxu0 %v1239
    %1632 = vmatprep.subr.bf16.mxu0 0
    %1633 = vmatpush1.bf16.msra.mxu0 %v1240
    %1634 = vmatprep.subr.bf16.mxu0 0
    %1635 = vmatpush1.bf16.msra.mxu0 %v1241
    %1636 = vmatprep.subr.bf16.mxu0 0
    %1637 = vmatpush1.bf16.msra.mxu0 %v1242
    %1638 = vmatprep.subr.bf16.mxu0 0
    %1639 = vmatpush1.bf16.msra.mxu0 %v1243
    %1640 = vmatprep.subr.bf16.mxu0 0
    %1641 = vmatpush1.bf16.msra.mxu0 %v1244
    %1642 = vmatprep.subr.bf16.mxu0 0
    %1643 = vmatpush1.bf16.msra.mxu0 %v1245
    %1644 = vmatprep.subr.bf16.mxu0 0
    %1645 = vmatpush1.bf16.msra.mxu0 %v1246
    %1646 = vmatprep.subr.bf16.mxu0 0
    %1647 = vmatpush1.bf16.msra.mxu0 %v1247
    %1648 = vmatprep.mubr.bf16.mxu0 %v57
    %1649 = vmatmul.mubr.bf16.gmra.mrb[0].mxu0 %v56
    %v1650 = vpop.f32.mrb[0].mxu0
    %v1651 = vadd.f32 0.0, %v1650
    %v1652 = vpop.f32.mrb[0].mxu0
    %v1653 = vpop.f32.mrb[0].mxu0
    %v1654 = vpop.f32.mrb[0].mxu0
    %1655 = vdwg.mxu0
    %1656 = vmatprep.subr.bf16.mxu0 0
    %1657 = vmatpush1.bf16.msra.mxu0 %v1248
    %1658 = vmatprep.subr.bf16.mxu0 0
    %1659 = vmatpush1.bf16.msra.mxu0 %v1249
    %1660 = vmatprep.subr.bf16.mxu0 0
    %1661 = vmatpush1.bf16.msra.mxu0 %v1250
    %1662 = vmatprep.subr.bf16.mxu0 0
    %1663 = vmatpush1.bf16.msra.mxu0 %v1251
    %1664 = vmatprep.subr.bf16.mxu0 0
    %1665 = vmatpush1.bf16.msra.mxu0 %v1252
    %1666 = vmatprep.subr.bf16.mxu0 0
    %1667 = vmatpush1.bf16.msra.mxu0 %v1253
    %1668 = vmatprep.subr.bf16.mxu0 0
    %1669 = vmatpush1.bf16.msra.mxu0 %v1254
    %1670 = vmatprep.subr.bf16.mxu0 0
    %1671 = vmatpush1.bf16.msra.mxu0 %v1255
    %1672 = vmatprep.subr.bf16.mxu0 0
    %1673 = vmatpush1.bf16.msra.mxu0 %v1256
    %1674 = vmatprep.subr.bf16.mxu0 0
    %1675 = vmatpush1.bf16.msra.mxu0 %v1257
    %1676 = vmatprep.subr.bf16.mxu0 0
    %1677 = vmatpush1.bf16.msra.mxu0 %v1258
    %1678 = vmatprep.subr.bf16.mxu0 0
    %1679 = vmatpush1.bf16.msra.mxu0 %v1259
    %1680 = vmatprep.subr.bf16.mxu0 0
    %1681 = vmatpush1.bf16.msra.mxu0 %v1260
    %1682 = vmatprep.subr.bf16.mxu0 0
    %1683 = vmatpush1.bf16.msra.mxu0 %v1261
    %1684 = vmatprep.subr.bf16.mxu0 0
    %1685 = vmatpush1.bf16.msra.mxu0 %v1262
    %1686 = vmatprep.subr.bf16.mxu0 0
    %1687 = vmatpush1.bf16.msra.mxu0 %v1263
    %1688 = vmatprep.mubr.bf16.mxu0 %v59
    %1689 = vmatmul.mubr.bf16.gmra.mrb[0].mxu0 %v58
    %v1690 = vpop.f32.mrb[0].mxu0
    %v1691 = vadd.f32 %v1651, %v1690
    %v1692 = vpop.f32.mrb[0].mxu0
    %v1693 = vpop.f32.mrb[0].mxu0
    %v1694 = vpop.f32.mrb[0].mxu0
    %1695 = vdwg.mxu0
    %1696 = vmatprep.subr.bf16.mxu0 0
    %1697 = vmatpush1.bf16.msra.mxu0 %v1264
    %1698 = vmatprep.subr.bf16.mxu0 0
    %1699 = vmatpush1.bf16.msra.mxu0 %v1265
    %1700 = vmatprep.subr.bf16.mxu0 0
    %1701 = vmatpush1.bf16.msra.mxu0 %v1266
    %1702 = vmatprep.subr.bf16.mxu0 0
    %1703 = vmatpush1.bf16.msra.mxu0 %v1267
    %1704 = vmatprep.subr.bf16.mxu0 0
    %1705 = vmatpush1.bf16.msra.mxu0 %v1268
    %1706 = vmatprep.subr.bf16.mxu0 0
    %1707 = vmatpush1.bf16.msra.mxu0 %v1269
    %1708 = vmatprep.subr.bf16.mxu0 0
    %1709 = vmatpush1.bf16.msra.mxu0 %v1270
    %1710 = vmatprep.subr.bf16.mxu0 0
    %1711 = vmatpush1.bf16.msra.mxu0 %v1271
    %1712 = vmatprep.subr.bf16.mxu0 0
    %1713 = vmatpush1.bf16.msra.mxu0 %v1272
    %1714 = vmatprep.subr.bf16.mxu0 0
    %1715 = vmatpush1.bf16.msra.mxu0 %v1273
    %1716 = vmatprep.subr.bf16.mxu0 0
    %1717 = vmatpush1.bf16.msra.mxu0 %v1274
    %1718 = vmatprep.subr.bf16.mxu0 0
    %1719 = vmatpush1.bf16.msra.mxu0 %v1275
    %1720 = vmatprep.subr.bf16.mxu0 0
    %1721 = vmatpush1.bf16.msra.mxu0 %v1276
    %1722 = vmatprep.subr.bf16.mxu0 0
    %1723 = vmatpush1.bf16.msra.mxu0 %v1277
    %1724 = vmatprep.subr.bf16.mxu0 0
    %1725 = vmatpush1.bf16.msra.mxu0 %v1278
    %1726 = vmatprep.subr.bf16.mxu0 0
    %1727 = vmatpush1.bf16.msra.mxu0 %v1279
    %1728 = vmatprep.mubr.bf16.mxu0 %v61
    %1729 = vmatmul.mubr.bf16.gmra.mrb[0].mxu0 %v60
    %v1730 = vpop.f32.mrb[0].mxu0
    %v1731 = vadd.f32 %v1691, %v1730
    %v1732 = vpop.f32.mrb[0].mxu0
    %v1733 = vpop.f32.mrb[0].mxu0
    %v1734 = vpop.f32.mrb[0].mxu0
    %1735 = vdwg.mxu0
    %1736 = vmatprep.subr.bf16.mxu0 0
    %1737 = vmatpush1.bf16.msra.mxu0 %v1280
    %1738 = vmatprep.subr.bf16.mxu0 0
    %1739 = vmatpush1.bf16.msra.mxu0 %v1281
    %1740 = vmatprep.subr.bf16.mxu0 0
    %1741 = vmatpush1.bf16.msra.mxu0 %v1282
    %1742 = vmatprep.subr.bf16.mxu0 0
    %1743 = vmatpush1.bf16.msra.mxu0 %v1283
    %1744 = vmatprep.subr.bf16.mxu0 0
    %1745 = vmatpush1.bf16.msra.mxu0 %v1284
    %1746 = vmatprep.subr.bf16.mxu0 0
    %1747 = vmatpush1.bf16.msra.mxu0 %v1285
    %1748 = vmatprep.subr.bf16.mxu0 0
    %1749 = vmatpush1.bf16.msra.mxu0 %v1286
    %1750 = vmatprep.subr.bf16.mxu0 0
    %1751 = vmatpush1.bf16.msra.mxu0 %v1287
    %1752 = vmatprep.subr.bf16.mxu0 0
    %1753 = vmatpush1.bf16.msra.mxu0 %v1288
    %1754 = vmatprep.subr.bf16.mxu0 0
    %1755 = vmatpush1.bf16.msra.mxu0 %v1289
    %1756 = vmatprep.subr.bf16.mxu0 0
    %1757 = vmatpush1.bf16.msra.mxu0 %v1290
    %1758 = vmatprep.subr.bf16.mxu0 0
    %1759 = vmatpush1.bf16.msra.mxu0 %v1291
    %1760 = vmatprep.subr.bf16.mxu0 0
    %1761 = vmatpush1.bf16.msra.mxu0 %v1292
    %1762 = vmatprep.subr.bf16.mxu0 0
    %1763 = vmatpush1.bf16.msra.mxu0 %v1293
    %1764 = vmatprep.subr.bf16.mxu0 0
    %1765 = vmatpush1.bf16.msra.mxu0 %v1294
    %1766 = vmatprep.subr.bf16.mxu0 0
    %1767 = vmatpush1.bf16.msra.mxu0 %v1295
    %1768 = vmatprep.mubr.bf16.mxu0 %v63
    %1769 = vmatmul.mubr.bf16.gmra.mrb[0].mxu0 %v62
    %v1770 = vpop.f32.mrb[0].mxu0
    %v1771 = vadd.f32 %v1731, %v1770
    %v1772 = vpop.f32.mrb[0].mxu0
    %v1773 = vpop.f32.mrb[0].mxu0
    %v1774 = vpop.f32.mrb[0].mxu0
    %1775 = vdwg.mxu0
    %1776 = vmatprep.subr.bf16.mxu0 0
    %1777 = vmatpush1.bf16.msra.mxu0 %v1296
    %1778 = vmatprep.subr.bf16.mxu0 0
    %1779 = vmatpush1.bf16.msra.mxu0 %v1297
    %1780 = vmatprep.subr.bf16.mxu0 0
    %1781 = vmatpush1.bf16.msra.mxu0 %v1298
    %1782 = vmatprep.subr.bf16.mxu0 0
    %1783 = vmatpush1.bf16.msra.mxu0 %v1299
    %1784 = vmatprep.subr.bf16.mxu0 0
    %1785 = vmatpush1.bf16.msra.mxu0 %v1300
    %1786 = vmatprep.subr.bf16.mxu0 0
    %1787 = vmatpush1.bf16.msra.mxu0 %v1301
    %1788 = vmatprep.subr.bf16.mxu0 0
    %1789 = vmatpush1.bf16.msra.mxu0 %v1302
    %1790 = vmatprep.subr.bf16.mxu0 0
    %1791 = vmatpush1.bf16.msra.mxu0 %v1303
    %1792 = vmatprep.subr.bf16.mxu0 0
    %1793 = vmatpush1.bf16.msra.mxu0 %v1304
    %1794 = vmatprep.subr.bf16.mxu0 0
    %1795 = vmatpush1.bf16.msra.mxu0 %v1305
    %1796 = vmatprep.subr.bf16.mxu0 0
    %1797 = vmatpush1.bf16.msra.mxu0 %v1306
    %1798 = vmatprep.subr.bf16.mxu0 0
    %1799 = vmatpush1.bf16.msra.mxu0 %v1307
    %1800 = vmatprep.subr.bf16.mxu0 0
    %1801 = vmatpush1.bf16.msra.mxu0 %v1308
    %1802 = vmatprep.subr.bf16.mxu0 0
    %1803 = vmatpush1.bf16.msra.mxu0 %v1309
    %1804 = vmatprep.subr.bf16.mxu0 0
    %1805 = vmatpush1.bf16.msra.mxu0 %v1310
    %1806 = vmatprep.subr.bf16.mxu0 0
    %1807 = vmatpush1.bf16.msra.mxu0 %v1311
    %1808 = vmatprep.mubr.bf16.mxu0 %v65
    %1809 = vmatmul.mubr.bf16.gmra.mrb[0].mxu0 %v64
    %v1810 = vpop.f32.mrb[0].mxu0
    %v1811 = vadd.f32 %v1771, %v1810
    %v1812 = vpop.f32.mrb[0].mxu0
    %v1813 = vpop.f32.mrb[0].mxu0
    %v1814 = vpop.f32.mrb[0].mxu0
    %1815 = vdwg.mxu0
    %1816 = vmatprep.subr.bf16.mxu0 0
    %1817 = vmatpush1.bf16.msra.mxu0 %v1312
    %1818 = vmatprep.subr.bf16.mxu0 0
    %1819 = vmatpush1.bf16.msra.mxu0 %v1313
    %1820 = vmatprep.subr.bf16.mxu0 0
    %1821 = vmatpush1.bf16.msra.mxu0 %v1314
    %1822 = vmatprep.subr.bf16.mxu0 0
    %1823 = vmatpush1.bf16.msra.mxu0 %v1315
    %1824 = vmatprep.subr.bf16.mxu0 0
    %1825 = vmatpush1.bf16.msra.mxu0 %v1316
    %1826 = vmatprep.subr.bf16.mxu0 0
    %1827 = vmatpush1.bf16.msra.mxu0 %v1317
    %1828 = vmatprep.subr.bf16.mxu0 0
    %1829 = vmatpush1.bf16.msra.mxu0 %v1318
    %1830 = vmatprep.subr.bf16.mxu0 0
    %1831 = vmatpush1.bf16.msra.mxu0 %v1319
    %1832 = vmatprep.subr.bf16.mxu0 0
    %1833 = vmatpush1.bf16.msra.mxu0 %v1320
    %1834 = vmatprep.subr.bf16.mxu0 0
    %1835 = vmatpush1.bf16.msra.mxu0 %v1321
    %1836 = vmatprep.subr.bf16.mxu0 0
    %1837 = vmatpush1.bf16.msra.mxu0 %v1322
    %1838 = vmatprep.subr.bf16.mxu0 0
    %1839 = vmatpush1.bf16.msra.mxu0 %v1323
    %1840 = vmatprep.subr.bf16.mxu0 0
    %1841 = vmatpush1.bf16.msra.mxu0 %v1324
    %1842 = vmatprep.subr.bf16.mxu0 0
    %1843 = vmatpush1.bf16.msra.mxu0 %v1325
    %1844 = vmatprep.subr.bf16.mxu0 0
    %1845 = vmatpush1.bf16.msra.mxu0 %v1326
    %1846 = vmatprep.subr.bf16.mxu0 0
    %1847 = vmatpush1.bf16.msra.mxu0 %v1327
    %1848 = vmatprep.mubr.bf16.mxu0 %v67
    %1849 = vmatmul.mubr.bf16.gmra.mrb[0].mxu0 %v66
    %v1850 = vpop.f32.mrb[0].mxu0
    %v1851 = vadd.f32 %v1811, %v1850
    %v1852 = vpop.f32.mrb[0].mxu0
    %v1853 = vpop.f32.mrb[0].mxu0
    %v1854 = vpop.f32.mrb[0].mxu0
    %1855 = vdwg.mxu0
    %1856 = vmatprep.subr.bf16.mxu0 0
    %1857 = vmatpush1.bf16.msra.mxu0 %v1328
    %1858 = vmatprep.subr.bf16.mxu0 0
    %1859 = vmatpush1.bf16.msra.mxu0 %v1329
    %1860 = vmatprep.subr.bf16.mxu0 0
    %1861 = vmatpush1.bf16.msra.mxu0 %v1330
    %1862 = vmatprep.subr.bf16.mxu0 0
    %1863 = vmatpush1.bf16.msra.mxu0 %v1331
    %1864 = vmatprep.subr.bf16.mxu0 0
    %1865 = vmatpush1.bf16.msra.mxu0 %v1332
    %1866 = vmatprep.subr.bf16.mxu0 0
    %1867 = vmatpush1.bf16.msra.mxu0 %v1333
    %1868 = vmatprep.subr.bf16.mxu0 0
    %1869 = vmatpush1.bf16.msra.mxu0 %v1334
    %1870 = vmatprep.subr.bf16.mxu0 0
    %1871 = vmatpush1.bf16.msra.mxu0 %v1335
    %1872 = vmatprep.subr.bf16.mxu0 0
    %1873 = vmatpush1.bf16.msra.mxu0 %v1336
    %1874 = vmatprep.subr.bf16.mxu0 0
    %1875 = vmatpush1.bf16.msra.mxu0 %v1337
    %1876 = vmatprep.subr.bf16.mxu0 0
    %1877 = vmatpush1.bf16.msra.mxu0 %v1338
    %1878 = vmatprep.subr.bf16.mxu0 0
    %1879 = vmatpush1.bf16.msra.mxu0 %v1339
    %1880 = vmatprep.subr.bf16.mxu0 0
    %1881 = vmatpush1.bf16.msra.mxu0 %v1340
    %1882 = vmatprep.subr.bf16.mxu0 0
    %1883 = vmatpush1.bf16.msra.mxu0 %v1341
    %1884 = vmatprep.subr.bf16.mxu0 0
    %1885 = vmatpush1.bf16.msra.mxu0 %v1342
    %1886 = vmatprep.subr.bf16.mxu0 0
    %1887 = vmatpush1.bf16.msra.mxu0 %v1343
    %1888 = vmatprep.mubr.bf16.mxu0 %v69
    %1889 = vmatmul.mubr.bf16.gmra.mrb[0].mxu0 %v68
    %v1890 = vpop.f32.mrb[0].mxu0
    %v1891 = vadd.f32 %v1851, %v1890
    %v1892 = vpop.f32.mrb[0].mxu0
    %v1893 = vpop.f32.mrb[0].mxu0
    %v1894 = vpop.f32.mrb[0].mxu0
    %1895 = vdwg.mxu0
    %1896 = vmatprep.subr.bf16.mxu0 0
    %1897 = vmatpush1.bf16.msra.mxu0 %v1344
    %1898 = vmatprep.subr.bf16.mxu0 0
    %1899 = vmatpush1.bf16.msra.mxu0 %v1345
    %1900 = vmatprep.subr.bf16.mxu0 0
    %1901 = vmatpush1.bf16.msra.mxu0 %v1346
    %1902 = vmatprep.subr.bf16.mxu0 0
    %1903 = vmatpush1.bf16.msra.mxu0 %v1347
    %1904 = vmatprep.subr.bf16.mxu0 0
    %1905 = vmatpush1.bf16.msra.mxu0 %v1348
    %1906 = vmatprep.subr.bf16.mxu0 0
    %1907 = vmatpush1.bf16.msra.mxu0 %v1349
    %1908 = vmatprep.subr.bf16.mxu0 0
    %1909 = vmatpush1.bf16.msra.mxu0 %v1350
    %1910 = vmatprep.subr.bf16.mxu0 0
    %1911 = vmatpush1.bf16.msra.mxu0 %v1351
    %1912 = vmatprep.subr.bf16.mxu0 0
    %1913 = vmatpush1.bf16.msra.mxu0 %v1352
    %1914 = vmatprep.subr.bf16.mxu0 0
    %1915 = vmatpush1.bf16.msra.mxu0 %v1353
    %1916 = vmatprep.subr.bf16.mxu0 0
    %1917 = vmatpush1.bf16.msra.mxu0 %v1354
    %1918 = vmatprep.subr.bf16.mxu0 0
    %1919 = vmatpush1.bf16.msra.mxu0 %v1355
    %1920 = vmatprep.subr.bf16.mxu0 0
    %1921 = vmatpush1.bf16.msra.mxu0 %v1356
    %1922 = vmatprep.subr.bf16.mxu0 0
    %1923 = vmatpush1.bf16.msra.mxu0 %v1357
    %1924 = vmatprep.subr.bf16.mxu0 0
    %1925 = vmatpush1.bf16.msra.mxu0 %v1358
    %1926 = vmatprep.subr.bf16.mxu0 0
    %1927 = vmatpush1.bf16.msra.mxu0 %v1359
    %1928 = vmatprep.mubr.bf16.mxu0 %v71
    %1929 = vmatmul.mubr.bf16.gmra.mrb[0].mxu0 %v70
    %v1930 = vpop.f32.mrb[0].mxu0
    %v1931 = vadd.f32 %v1891, %v1930
    %v1932 = vpop.f32.mrb[0].mxu0
    %v1933 = vpop.f32.mrb[0].mxu0
    %v1934 = vpop.f32.mrb[0].mxu0
    %1935 = vdwg.mxu0
    %1936 = vmatprep.subr.bf16.mxu0 0
    %1937 = vmatpush1.bf16.msra.mxu0 %v1360
    %1938 = vmatprep.subr.bf16.mxu0 0
    %1939 = vmatpush1.bf16.msra.mxu0 %v1361
    %1940 = vmatprep.subr.bf16.mxu0 0
    %1941 = vmatpush1.bf16.msra.mxu0 %v1362
    %1942 = vmatprep.subr.bf16.mxu0 0
    %1943 = vmatpush1.bf16.msra.mxu0 %v1363
    %1944 = vmatprep.subr.bf16.mxu0 0
    %1945 = vmatpush1.bf16.msra.mxu0 %v1364
    %1946 = vmatprep.subr.bf16.mxu0 0
    %1947 = vmatpush1.bf16.msra.mxu0 %v1365
    %1948 = vmatprep.subr.bf16.mxu0 0
    %1949 = vmatpush1.bf16.msra.mxu0 %v1366
    %1950 = vmatprep.subr.bf16.mxu0 0
    %1951 = vmatpush1.bf16.msra.mxu0 %v1367
    %1952 = vmatprep.subr.bf16.mxu0 0
    %1953 = vmatpush1.bf16.msra.mxu0 %v1368
    %1954 = vmatprep.subr.bf16.mxu0 0
    %1955 = vmatpush1.bf16.msra.mxu0 %v1369
    %1956 = vmatprep.subr.bf16.mxu0 0
    %1957 = vmatpush1.bf16.msra.mxu0 %v1370
    %1958 = vmatprep.subr.bf16.mxu0 0
    %1959 = vmatpush1.bf16.msra.mxu0 %v1371
    %1960 = vmatprep.subr.bf16.mxu0 0
    %1961 = vmatpush1.bf16.msra.mxu0 %v1372
    %1962 = vmatprep.subr.bf16.mxu0 0
    %1963 = vmatpush1.bf16.msra.mxu0 %v1373
    %1964 = vmatprep.subr.bf16.mxu0 0
    %1965 = vmatpush1.bf16.msra.mxu0 %v1374
    %1966 = vmatprep.subr.bf16.mxu0 0
    %1967 = vmatpush1.bf16.msra.mxu0 %v1375
    %1968 = vmatprep.mubr.bf16.mxu0 %v73
    %1969 = vmatmul.mubr.bf16.gmra.mrb[0].mxu0 %v72
    %v1970 = vpop.f32.mrb[0].mxu0
    %v1971 = vadd.f32 %v1931, %v1970
    %v1972 = vpop.f32.mrb[0].mxu0
    %v1973 = vpop.f32.mrb[0].mxu0
    %v1974 = vpop.f32.mrb[0].mxu0
    %1975 = vdwg.mxu0
    %1976 = vmatprep.subr.bf16.mxu0 0
    %1977 = vmatpush1.bf16.msra.mxu0 %v1376
    %1978 = vmatprep.subr.bf16.mxu0 0
    %1979 = vmatpush1.bf16.msra.mxu0 %v1377
    %1980 = vmatprep.subr.bf16.mxu0 0
    %1981 = vmatpush1.bf16.msra.mxu0 %v1378
    %1982 = vmatprep.subr.bf16.mxu0 0
    %1983 = vmatpush1.bf16.msra.mxu0 %v1379
    %1984 = vmatprep.subr.bf16.mxu0 0
    %1985 = vmatpush1.bf16.msra.mxu0 %v1380
    %1986 = vmatprep.subr.bf16.mxu0 0
    %1987 = vmatpush1.bf16.msra.mxu0 %v1381
    %1988 = vmatprep.subr.bf16.mxu0 0
    %1989 = vmatpush1.bf16.msra.mxu0 %v1382
    %1990 = vmatprep.subr.bf16.mxu0 0
    %1991 = vmatpush1.bf16.msra.mxu0 %v1383
    %1992 = vmatprep.subr.bf16.mxu0 0
    %1993 = vmatpush1.bf16.msra.mxu0 %v1384
    %1994 = vmatprep.subr.bf16.mxu0 0
    %1995 = vmatpush1.bf16.msra.mxu0 %v1385
    %1996 = vmatprep.subr.bf16.mxu0 0
    %1997 = vmatpush1.bf16.msra.mxu0 %v1386
    %1998 = vmatprep.subr.bf16.mxu0 0
    %1999 = vmatpush1.bf16.msra.mxu0 %v1387
    %2000 = vmatprep.subr.bf16.mxu0 0
    %2001 = vmatpush1.bf16.msra.mxu0 %v1388
    %2002 = vmatprep.subr.bf16.mxu0 0
    %2003 = vmatpush1.bf16.msra.mxu0 %v1389
    %2004 = vmatprep.subr.bf16.mxu0 0
    %2005 = vmatpush1.bf16.msra.mxu0 %v1390
    %2006 = vmatprep.subr.bf16.mxu0 0
    %2007 = vmatpush1.bf16.msra.mxu0 %v1391
    %2008 = vmatprep.mubr.bf16.mxu0 %v75
    %2009 = vmatmul.mubr.bf16.gmra.mrb[0].mxu0 %v74
    %v2010 = vpop.f32.mrb[0].mxu0
    %v2011 = vadd.f32 %v1971, %v2010
    %v2012 = vpop.f32.mrb[0].mxu0
    %v2013 = vpop.f32.mrb[0].mxu0
    %v2014 = vpop.f32.mrb[0].mxu0
    %2015 = vdwg.mxu0
    %2016 = vmatprep.subr.bf16.mxu0 0
    %2017 = vmatpush1.bf16.msra.mxu0 %v1392
    %2018 = vmatprep.subr.bf16.mxu0 0
    %2019 = vmatpush1.bf16.msra.mxu0 %v1393
    %2020 = vmatprep.subr.bf16.mxu0 0
    %2021 = vmatpush1.bf16.msra.mxu0 %v1394
    %2022 = vmatprep.subr.bf16.mxu0 0
    %2023 = vmatpush1.bf16.msra.mxu0 %v1395
    %2024 = vmatprep.subr.bf16.mxu0 0
    %2025 = vmatpush1.bf16.msra.mxu0 %v1396
    %2026 = vmatprep.subr.bf16.mxu0 0
    %2027 = vmatpush1.bf16.msra.mxu0 %v1397
    %2028 = vmatprep.subr.bf16.mxu0 0
    %2029 = vmatpush1.bf16.msra.mxu0 %v1398
    %2030 = vmatprep.subr.bf16.mxu0 0
    %2031 = vmatpush1.bf16.msra.mxu0 %v1399
    %2032 = vmatprep.subr.bf16.mxu0 0
    %2033 = vmatpush1.bf16.msra.mxu0 %v1400
    %2034 = vmatprep.subr.bf16.mxu0 0
    %2035 = vmatpush1.bf16.msra.mxu0 %v1401
    %2036 = vmatprep.subr.bf16.mxu0 0
    %2037 = vmatpush1.bf16.msra.mxu0 %v1402
    %2038 = vmatprep.subr.bf16.mxu0 0
    %2039 = vmatpush1.bf16.msra.mxu0 %v1403
    %2040 = vmatprep.subr.bf16.mxu0 0
    %2041 = vmatpush1.bf16.msra.mxu0 %v1404
    %2042 = vmatprep.subr.bf16.mxu0 0
    %2043 = vmatpush1.bf16.msra.mxu0 %v1405
    %2044 = vmatprep.subr.bf16.mxu0 0
    %2045 = vmatpush1.bf16.msra.mxu0 %v1406
    %2046 = vmatprep.subr.bf16.mxu0 0
    %2047 = vmatpush1.bf16.msra.mxu0 %v1407
    %2048 = vmatprep.mubr.bf16.mxu0 %v77
    %2049 = vmatmul.mubr.bf16.gmra.mrb[0].mxu0 %v76
    %v2050 = vpop.f32.mrb[0].mxu0
    %v2051 = vadd.f32 %v2011, %v2050
    %v2052 = vpop.f32.mrb[0].mxu0
    %v2053 = vpop.f32.mrb[0].mxu0
    %v2054 = vpop.f32.mrb[0].mxu0
    %2055 = vdwg.mxu0
    %2056 = vmatprep.subr.bf16.mxu0 0
    %2057 = vmatpush1.bf16.msra.mxu0 %v1408
    %2058 = vmatprep.subr.bf16.mxu0 0
    %2059 = vmatpush1.bf16.msra.mxu0 %v1409
    %2060 = vmatprep.subr.bf16.mxu0 0
    %2061 = vmatpush1.bf16.msra.mxu0 %v1410
    %2062 = vmatprep.subr.bf16.mxu0 0
    %2063 = vmatpush1.bf16.msra.mxu0 %v1411
    %2064 = vmatprep.subr.bf16.mxu0 0
    %2065 = vmatpush1.bf16.msra.mxu0 %v1412
    %2066 = vmatprep.subr.bf16.mxu0 0
    %2067 = vmatpush1.bf16.msra.mxu0 %v1413
    %2068 = vmatprep.subr.bf16.mxu0 0
    %2069 = vmatpush1.bf16.msra.mxu0 %v1414
    %2070 = vmatprep.subr.bf16.mxu0 0
    %2071 = vmatpush1.bf16.msra.mxu0 %v1415
    %2072 = vmatprep.subr.bf16.mxu0 0
    %2073 = vmatpush1.bf16.msra.mxu0 %v1416
    %2074 = vmatprep.subr.bf16.mxu0 0
    %2075 = vmatpush1.bf16.msra.mxu0 %v1417
    %2076 = vmatprep.subr.bf16.mxu0 0
    %2077 = vmatpush1.bf16.msra.mxu0 %v1418
    %2078 = vmatprep.subr.bf16.mxu0 0
    %2079 = vmatpush1.bf16.msra.mxu0 %v1419
    %2080 = vmatprep.subr.bf16.mxu0 0
    %2081 = vmatpush1.bf16.msra.mxu0 %v1420
    %2082 = vmatprep.subr.bf16.mxu0 0
    %2083 = vmatpush1.bf16.msra.mxu0 %v1421
    %2084 = vmatprep.subr.bf16.mxu0 0
    %2085 = vmatpush1.bf16.msra.mxu0 %v1422
    %2086 = vmatprep.subr.bf16.mxu0 0
    %2087 = vmatpush1.bf16.msra.mxu0 %v1423
    %2088 = vmatprep.mubr.bf16.mxu0 %v79
    %2089 = vmatmul.mubr.bf16.gmra.mrb[0].mxu0 %v78
    %v2090 = vpop.f32.mrb[0].mxu0
    %v2091 = vadd.f32 %v2051, %v2090
    %v2092 = vpop.f32.mrb[0].mxu0
    %v2093 = vpop.f32.mrb[0].mxu0
    %v2094 = vpop.f32.mrb[0].mxu0
    %2095 = vdwg.mxu0
    %v2096 = vmul.f32 %v2091, %v2091
    %2097 = vadd.xlane.f32.xlu0 %v2096
    %v2098 = vpop.xlane.xlu0 %2097
    %v2099 = vrsqrt.pop %v2098
    %v2100 = vmul.f32 %v2091, %v2099
    %v2101 = vpack.c.bf16 %v2100, %v2100
    %v2102 = vlaneseq
    %v2103 = vshrl.u32 %v2102, 7
    %v2104 = vlaneseq
    %v2105 = vand.u32 %v2104, 127
    %v2106 = vmul.u32 %v2103, 4
    %vm2107 = vcmp.ge.s32.totalorder %v2105, %v2106
    %v2108 = vadd.s32 %v2106, 4
    %vm2109 = vcmp.lt.s32.totalorder %v2105, %v2108
    %vm2110 = vmand %vm2107, %vm2109
    %v2111 = vsel %vm2110, 0.25, 0.0
    %v2112 = vpack.c.bf16 %v2111, %v2111
    %vm2113 = vcmask 64512
    %v2115 = vsel %vm2113, %v2112, 0
    %vm2117 = vcmask 1043456
    %v2119 = vsel %vm2117, %v2101, 0
    %2121 = vmatprep.subr.bf16.mxu0 0
    %2122 = vmatpush1.bf16.msra.mxu0 %v2119
    %2123 = vmatprep.subr.bf16.mxu0 0
    %2124 = vmatpush1.bf16.msra.mxu0 0
    %2125 = vmatprep.subr.bf16.mxu0 0
    %2126 = vmatpush1.bf16.msra.mxu0 0
    %2127 = vmatprep.subr.bf16.mxu0 0
    %2128 = vmatpush1.bf16.msra.mxu0 0
    %2129 = vmatprep.subr.bf16.mxu0 0
    %2130 = vmatpush1.bf16.msra.mxu0 0
    %2131 = vmatprep.subr.bf16.mxu0 0
    %2132 = vmatpush1.bf16.msra.mxu0 0
    %2133 = vmatprep.subr.bf16.mxu0 0
    %2134 = vmatpush1.bf16.msra.mxu0 0
    %2135 = vmatprep.subr.bf16.mxu0 0
    %2136 = vmatpush1.bf16.msra.mxu0 0
    %2137 = vmatprep.subr.bf16.mxu0 0
    %2138 = vmatpush1.bf16.msra.mxu0 0
    %2139 = vmatprep.subr.bf16.mxu0 0
    %2140 = vmatpush1.bf16.msra.mxu0 0
    %2141 = vmatprep.subr.bf16.mxu0 0
    %2142 = vmatpush1.bf16.msra.mxu0 0
    %2143 = vmatprep.subr.bf16.mxu0 0
    %2144 = vmatpush1.bf16.msra.mxu0 0
    %2145 = vmatprep.subr.bf16.mxu0 0
    %2146 = vmatpush1.bf16.msra.mxu0 0
    %2147 = vmatprep.subr.bf16.mxu0 0
    %2148 = vmatpush1.bf16.msra.mxu0 0
    %2149 = vmatprep.subr.bf16.mxu0 0
    %2150 = vmatpush1.bf16.msra.mxu0 0
    %2151 = vmatprep.subr.bf16.mxu0 0
    %2152 = vmatpush1.bf16.msra.mxu0 0
    %2153 = vmatprep.mubr.bf16.mxu0 0
    %2154 = vmatmul.mubr.bf16.gmra.mrb[0].mxu0 %v2115
    %v2155 = vpop.f32.mrb[0].mxu0
    %v2156 = vadd.f32 0.0, %v2155
    %v2157 = vpop.f32.mrb[0].mxu0
    %v2158 = vpop.f32.mrb[0].mxu0
    %v2159 = vpop.f32.mrb[0].mxu0
    %2160 = vdwg.mxu0
    %v2161 = vpack.c.bf16 %v2156, %v2156
    %v2162 = vld [vmem:[%s2] sm:$0xf]
    %v2163 = vld [vmem:[%s2 + $0x4] sm:$0xf]
    %v2164 = vld [vmem:[%s2 + $0x8] sm:$0xf]
    %v2165 = vld [vmem:[%s2 + $0xc] sm:$0xf]
    %v2166 = vld [vmem:[%s2 + $0x10] sm:$0xf]
    %v2167 = vld [vmem:[%s2 + $0x14] sm:$0xf]
    %v2168 = vld [vmem:[%s2 + $0x18] sm:$0xf]
    %v2169 = vld [vmem:[%s2 + $0x1c] sm:$0xf]
    %v2170 = vld [vmem:[%s2 + $0x20] sm:$0xf]
    %v2171 = vld [vmem:[%s2 + $0x24] sm:$0xf]
    %v2172 = vld [vmem:[%s2 + $0x28] sm:$0xf]
    %v2173 = vld [vmem:[%s2 + $0x2c] sm:$0xf]
    %v2174 = vld [vmem:[%s2 + $0x30] sm:$0xf]
    %v2175 = vld [vmem:[%s2 + $0x34] sm:$0xf]
    %v2176 = vld [vmem:[%s2 + $0x38] sm:$0xf]
    %v2177 = vld [vmem:[%s2 + $0x3c] sm:$0xf]
    %v2194 = vunpack.c.l.b16 %v2162
    %v2195 = vunpack.c.l.b16 %v2163
    %v2196 = vunpack.c.l.b16 %v2164
    %v2197 = vunpack.c.l.b16 %v2165
    %v2198 = vunpack.c.l.b16 %v2166
    %v2199 = vunpack.c.l.b16 %v2167
    %v2200 = vunpack.c.l.b16 %v2168
    %v2201 = vunpack.c.l.b16 %v2169
    %v2202 = vunpack.c.l.b16 %v2170
    %v2203 = vunpack.c.l.b16 %v2171
    %v2204 = vunpack.c.l.b16 %v2172
    %v2205 = vunpack.c.l.b16 %v2173
    %v2206 = vunpack.c.l.b16 %v2174
    %v2207 = vunpack.c.l.b16 %v2175
    %v2208 = vunpack.c.l.b16 %v2176
    %v2209 = vunpack.c.l.b16 %v2177
    %v2210 = vpack.c.b16 %v2195, %v2194
    %v2211 = vpack.c.b16 %v2197, %v2196
    %v2212 = vpack.c.b16 %v2199, %v2198
    %v2213 = vpack.c.b16 %v2201, %v2200
    %v2214 = vpack.c.b16 %v2203, %v2202
    %v2215 = vpack.c.b16 %v2205, %v2204
    %v2216 = vpack.c.b16 %v2207, %v2206
    %v2217 = vpack.c.b16 %v2209, %v2208
    %2226 = vmatprep.subr.bf16.mxu0 0
    %2227 = vmatpush1.bf16.msra.mxu0 %v2210
    %2228 = vmatprep.subr.bf16.mxu0 0
    %2229 = vmatpush1.bf16.msra.mxu0 %v2211
    %2230 = vmatprep.subr.bf16.mxu0 0
    %2231 = vmatpush1.bf16.msra.mxu0 %v2212
    %2232 = vmatprep.subr.bf16.mxu0 0
    %2233 = vmatpush1.bf16.msra.mxu0 %v2213
    %2234 = vmatprep.subr.bf16.mxu0 0
    %2235 = vmatpush1.bf16.msra.mxu0 %v2214
    %2236 = vmatprep.subr.bf16.mxu0 0
    %2237 = vmatpush1.bf16.msra.mxu0 %v2215
    %2238 = vmatprep.subr.bf16.mxu0 0
    %2239 = vmatpush1.bf16.msra.mxu0 %v2216
    %2240 = vmatprep.subr.bf16.mxu0 0
    %2241 = vmatpush1.bf16.msra.mxu0 %v2217
    %2242 = vmatprep.subr.bf16.mxu0 0
    %2243 = vmatpush1.bf16.msra.mxu0 0
    %2244 = vmatprep.subr.bf16.mxu0 0
    %2245 = vmatpush1.bf16.msra.mxu0 0
    %2246 = vmatprep.subr.bf16.mxu0 0
    %2247 = vmatpush1.bf16.msra.mxu0 0
    %2248 = vmatprep.subr.bf16.mxu0 0
    %2249 = vmatpush1.bf16.msra.mxu0 0
    %2250 = vmatprep.subr.bf16.mxu0 0
    %2251 = vmatpush1.bf16.msra.mxu0 0
    %2252 = vmatprep.subr.bf16.mxu0 0
    %2253 = vmatpush1.bf16.msra.mxu0 0
    %2254 = vmatprep.subr.bf16.mxu0 0
    %2255 = vmatpush1.bf16.msra.mxu0 0
    %2256 = vmatprep.subr.bf16.mxu0 0
    %2257 = vmatpush1.bf16.msra.mxu0 0
    %2258 = vmatprep.mubr.bf16.mxu0 0
    %2259 = vmatmul.mubr.bf16.gmra.mrb[0].mxu0 %v2161
    %v2260 = vpop.f32.mrb[0].mxu0
    %v2261 = vadd.f32 0.0, %v2260
    %v2262 = vpop.f32.mrb[0].mxu0
    %v2263 = vpop.f32.mrb[0].mxu0
    %v2264 = vpop.f32.mrb[0].mxu0
    %2265 = vdwg.mxu0
    %vm2266 = vcmp.lt.s32.totalorder %v2105, 70
    %v2267 = vsel %vm2266, %v2261, -inf
    %vm2268 = vcmask 1041408
    %v2269 = vsel %vm2268, %v2267, -inf
    %2270 = vmax.xlane.f32.xlu0 %v2269
    %v2271 = vpop.xlane.xlu0 %2270
    %v2272 = vsub.f32 %v2267, %v2271
    %v2273 = vmul.f32 %v2272, 1.442695
    %v2274 = vpow.pop %v2273
    %v2275 = vsel %vm2268, %v2274, 0.0
    %2276 = vadd.xlane.f32.xlu0 %v2275
    %v2277 = vpop.xlane.xlu0 %2276
    %v2278 = vrcp.pop %v2277
    %v2279 = vmul.f32 %v2274, %v2278
    %v2280 = vld [vmem:[%s3] sm:$0xff]
    %v2281 = vld [vmem:[%s3 + $0x8] sm:$0xff]
    %v2282 = vld [vmem:[%s3 + $0x10] sm:$0xff]
    %v2283 = vld [vmem:[%s3 + $0x18] sm:$0xff]
    %v2284 = vld [vmem:[%s3 + $0x20] sm:$0xff]
    %v2285 = vld [vmem:[%s3 + $0x28] sm:$0xff]
    %v2286 = vld [vmem:[%s3 + $0x30] sm:$0xff]
    %v2287 = vld [vmem:[%s3 + $0x38] sm:$0xff]
    %v2288 = vld [vmem:[%s3 + $0x40] sm:$0xff]
    %v2289 = vld [vmem:[%s3 + $0x48] sm:$0xff]
    %v2290 = vld [vmem:[%s3 + $0x50] sm:$0xff]
    %v2291 = vld [vmem:[%s3 + $0x58] sm:$0xff]
    %v2292 = vld [vmem:[%s3 + $0x60] sm:$0xff]
    %v2293 = vld [vmem:[%s3 + $0x68] sm:$0xff]
    %v2294 = vld [vmem:[%s3 + $0x70] sm:$0xff]
    %v2295 = vld [vmem:[%s3 + $0x78] sm:$0xff]
    %2296 = vmatprep.subr.mxu0 0.0
    %2297 = vmatpush1.msra.mxu0 %v2280
    %2298 = vmatprep.subr.mxu0 0.0
    %2299 = vmatpush1.msra.mxu0 %v2281
    %2300 = vmatprep.subr.mxu0 0.0
    %2301 = vmatpush1.msra.mxu0 %v2282
    %2302 = vmatprep.subr.mxu0 0.0
    %2303 = vmatpush1.msra.mxu0 %v2283
    %2304 = vmatprep.subr.mxu0 0.0
    %2305 = vmatpush1.msra.mxu0 %v2284
    %2306 = vmatprep.subr.mxu0 0.0
    %2307 = vmatpush1.msra.mxu0 %v2285
    %2308 = vmatprep.subr.mxu0 0.0
    %2309 = vmatpush1.msra.mxu0 %v2286
    %2310 = vmatprep.subr.mxu0 0.0
    %2311 = vmatpush1.msra.mxu0 %v2287
    %2312 = vmatprep.subr.mxu0 0.0
    %2313 = vmatpush1.msra.mxu0 %v2288
    %2314 = vmatprep.subr.mxu0 0.0
    %2315 = vmatpush1.msra.mxu0 %v2289
    %2316 = vmatprep.subr.mxu0 0.0
    %2317 = vmatpush1.msra.mxu0 %v2290
    %2318 = vmatprep.subr.mxu0 0.0
    %2319 = vmatpush1.msra.mxu0 %v2291
    %2320 = vmatprep.subr.mxu0 0.0
    %2321 = vmatpush1.msra.mxu0 %v2292
    %2322 = vmatprep.subr.mxu0 0.0
    %2323 = vmatpush1.msra.mxu0 %v2293
    %2324 = vmatprep.subr.mxu0 0.0
    %2325 = vmatpush1.msra.mxu0 %v2294
    %2326 = vmatprep.subr.mxu0 0.0
    %2327 = vmatpush1.msra.mxu0 %v2295
    %2328 = vmatprep.subr.mxu0 0.0
    %2329 = vmatpush1.msra.mxu0 0.0
    %2330 = vmatprep.subr.mxu0 0.0
    %2331 = vmatpush1.msra.mxu0 0.0
    %2332 = vmatprep.subr.mxu0 0.0
    %2333 = vmatpush1.msra.mxu0 0.0
    %2334 = vmatprep.subr.mxu0 0.0
    %2335 = vmatpush1.msra.mxu0 0.0
    %2336 = vmatprep.subr.mxu0 0.0
    %2337 = vmatpush1.msra.mxu0 0.0
    %2338 = vmatprep.subr.mxu0 0.0
    %2339 = vmatpush1.msra.mxu0 0.0
    %2340 = vmatprep.subr.mxu0 0.0
    %2341 = vmatpush1.msra.mxu0 0.0
    %2342 = vmatprep.subr.mxu0 0.0
    %2343 = vmatpush1.msra.mxu0 0.0
    %2344 = vmatprep.subr.mxu0 0.0
    %2345 = vmatpush1.msra.mxu0 0.0
    %2346 = vmatprep.subr.mxu0 0.0
    %2347 = vmatpush1.msra.mxu0 0.0
    %2348 = vmatprep.subr.mxu0 0.0
    %2349 = vmatpush1.msra.mxu0 0.0
    %2350 = vmatprep.subr.mxu0 0.0
    %2351 = vmatpush1.msra.mxu0 0.0
    %2352 = vmatprep.subr.mxu0 0.0
    %2353 = vmatpush1.msra.mxu0 0.0
    %2354 = vmatprep.subr.mxu0 0.0
    %2355 = vmatpush1.msra.mxu0 0.0
    %2356 = vmatprep.subr.mxu0 0.0
    %2357 = vmatpush1.msra.mxu0 0.0
    %2358 = vmatprep.subr.mxu0 0.0
    %2359 = vmatpush1.msra.mxu0 0.0
    %2360 = vmatprep.mubr.f32.mxu0 0.0
    %2361 = vmatmul.mubr.f32.gmra.mrb[0].mxu0 %v2279
    %v2362 = vpop.f32.mrb[0].mxu0
    %v2363 = vadd.f32 0.0, %v2362
    %v2364 = vpop.f32.mrb[0].mxu0
    %2365 = vdwg.mxu0
    %2366 = vst [vmem:[%s4] sm:$0x3] %v2363
    // Predicated region
    $region22: #{v9_forward.1} parent=1 // pred_check
      _
    $region23: #{v9_forward.1} parent=1 // pred_check_branch
      %2368 = sbr.rel (0) target = $region25
    $region24: #{v9_forward.1} parent=1 // pred_region
      _
    $region25: #{v9_forward.1} parent=1 // pred_fallthru
      _
    // Predicated region
    $region26: #{v9_forward.1} parent=1 // pred_check
      _
    $region27: #{v9_forward.1} parent=1 // pred_check_branch
      %2370 = sbr.rel (0) target = $region29
    $region28: #{v9_forward.1} parent=1 // pred_region
      _
    $region29: #{v9_forward.1} parent=1 // pred_fallthru
      _
    %2371 = vsyncpa [#allocation3], 1

</llo_original>
